<compile_context>
chip_gen: v7x
topology: tpu7x:2x2x1
jax: 0.10.0
libtpu: 0.0.40
codegen_flags: <defaults>
</compile_context>

<pallas_src>
import functools

import jax
import jax.numpy as jnp
from jax.experimental import pallas as pl
from jax.experimental.pallas import tpu as pltpu

# Layer sizes of the PyTorch module.
ENC_DIMS = [(784, 256), (256, 64), (64, 20)]
DEC_DIMS = [(20, 64), (64, 256), (256, 784)]

IN_DIM = 784
FEAT_DIM = 20
FEAT_PAD = 128     # lane-dense feature block (zero-padded 20 -> 128)


def _round_up(n, m):
    return (n + m - 1) // m * m


def _pick_tile_m(batch):
    """Default batch tile: 512-1024 region, multiple of 16, >= 2 grid steps when possible."""
    b16 = _round_up(batch, 16)
    tile = min(1024, b16)              # cap keeps per-step VMEM portable (v7x: 64 MiB phys)
    if b16 >= 32:
        # Guarantee grid >= 2 so ("parallel",) actually shards across v7x's 2 TensorCores.
        tile = min(tile, _round_up(b16 // 2, 16))
    return max(16, _round_up(tile, 16))


def _ae_kernel(x_ref,
               w1, b1, w2, b2, w3, b3,          # encoder params (w: bf16, b: f32)
               w4, b4, w5, b5, w6, b6,          # decoder params
               recon_ref, feat_ref):
    """One batch tile.

    x_ref:     (TM, 784)  f32  (cast to bf16 in-kernel; saves a wrapper HBM pass)
    recon_ref: (TM, 784)  bf16 (default) or f32
    feat_ref:  (TM, 128)  f32  (columns 20..127 are exact zeros by construction)
    """

    def dense(h_bf16, w_ref, b_ref):
        # bf16 x bf16 on the MXU, f32 accumulation, f32 bias add.
        acc = jnp.dot(h_bf16, w_ref[...], preferred_element_type=jnp.float32)
        return acc + b_ref[...]

    x = x_ref[...].astype(jnp.bfloat16)                             # in-kernel cast

    # ----- encoder: Linear + ReLU x3 -----
    h = jnp.maximum(dense(x, w1, b1), 0.0)                          # f32 (TM, 256)
    h = jnp.maximum(dense(h.astype(jnp.bfloat16), w2, b2), 0.0)     # f32 (TM, 64)
    feat = jnp.maximum(dense(h.astype(jnp.bfloat16), w3, b3), 0.0)  # f32 (TM, 128)
    feat_ref[...] = feat.astype(feat_ref.dtype)                     # dense, unmasked store

    # ----- decoder: Linear + ReLU x2, Linear + Sigmoid -----
    h = jnp.maximum(dense(feat.astype(jnp.bfloat16), w4, b4), 0.0)  # f32 (TM, 64)
    h = jnp.maximum(dense(h.astype(jnp.bfloat16), w5, b5), 0.0)     # f32 (TM, 256)
    h = dense(h.astype(jnp.bfloat16), w6, b6)                       # f32 (TM, 784)

    # sigmoid = 1 / (1 + exp(-h)); exp + approximate reciprocal both go to the EUP
    # slot, so no VPU divide competes with the bias-add / ReLU / cast VALU work.
    recon = pl.reciprocal(1.0 + jnp.exp(-h), approx=True)
    recon_ref[...] = recon.astype(recon_ref.dtype)


def init_params(key):
    """Deterministic PyTorch-Linear-style init: U(-1/sqrt(fan_in), 1/sqrt(fan_in)).

    Weights are stored as (in_features, out_features) so the kernel computes y = x @ W + b.
    Biases are stored as (1, out_features) to keep everything >= 2-D for TPU layouts.
    Parameters are kept in f32; the wrapper casts weights (not biases) to bf16.
    """
    params = []
    for (fan_in, fan_out) in ENC_DIMS + DEC_DIMS:
        key, kw, kb = jax.random.split(key, 3)
        bound = 1.0 / jnp.sqrt(float(fan_in))
        w = jax.random.uniform(kw, (fan_in, fan_out), jnp.float32, -bound, bound)
        b = jax.random.uniform(kb, (1, fan_out), jnp.float32, -bound, bound)
        params += [w, b]
    return params


@functools.partial(jax.jit, static_argnames=("tile_m", "recon_dtype"))
def autoencoder_forward(x_nchw, params, tile_m=None, recon_dtype=jnp.bfloat16):
    """Mirrors AutoEncoder.forward: returns (recon (B,1,28,28), features (B,20))."""
    batch = x_nchw.shape[0]
    x_flat = x_nchw.reshape(batch, -1)                           # (B, 784), same as torch .view

    if tile_m is None:
        tile_m = _pick_tile_m(batch)
    tile_m = max(16, _round_up(int(tile_m), 16))                 # bf16 packs 16 rows / vreg
    b_pad = _round_up(batch, tile_m)
    grid = (b_pad // tile_m,)

    # Input stays f32 (cast happens inside the kernel); pad the batch only if needed.
    if b_pad != batch:
        x_flat = jnp.pad(x_flat, ((0, b_pad - batch), (0, 0)))

    # Prepare parameters: bf16 weights for the MXU, f32 biases. The encoder's last
    # layer (out) and decoder's first layer (in) are zero-padded 20 -> 128 so the
    # feature block is lane-dense; zero padding keeps the math bit-identical.
    w1, b1, w2, b2, w3, b3, w4, b4, w5, b5, w6, b6 = params
    w3 = jnp.pad(w3, ((0, 0), (0, FEAT_PAD - FEAT_DIM)))
    b3 = jnp.pad(b3, ((0, 0), (0, FEAT_PAD - FEAT_DIM)))
    w4 = jnp.pad(w4, ((0, FEAT_PAD - FEAT_DIM), (0, 0)))
    kernel_args = [w1, b1, w2, b2, w3, b3, w4, b4, w5, b5, w6, b6]
    kernel_args = [p.astype(jnp.bfloat16) if i % 2 == 0 else p
                   for i, p in enumerate(kernel_args)]

    # Input / output tiles move with the grid; weights/biases are full-array,
    # constant-index blocks (VMEM-resident, fetched once, not re-DMA'd per tile).
    in_specs = [pl.BlockSpec((tile_m, IN_DIM), lambda i: (i, 0))]
    for p in kernel_args:
        in_specs.append(pl.BlockSpec(p.shape, lambda i: (0, 0)))
    out_specs = (
        pl.BlockSpec((tile_m, IN_DIM), lambda i: (i, 0)),
        pl.BlockSpec((tile_m, FEAT_PAD), lambda i: (i, 0)),
    )

    macs = sum(fi * fo for fi, fo in ENC_DIMS + DEC_DIMS)        # 436,736 MACs / row
    recon_bytes = jnp.dtype(recon_dtype).itemsize
    bytes_accessed = (b_pad * IN_DIM * 4                         # f32 input
                      + b_pad * IN_DIM * recon_bytes             # recon output
                      + b_pad * FEAT_PAD * 4                     # feature output
                      + sum(p.size * p.dtype.itemsize for p in kernel_args))
    cost = pl.CostEstimate(flops=2 * b_pad * macs,
                           transcendentals=2 * b_pad * IN_DIM,   # exp + approx reciprocal
                           bytes_accessed=bytes_accessed)

    # Only raise the scoped-VMEM limit when the tile actually needs it; small/default
    # tiles keep the conservative compiler default (safe on every TPU generation).
    cp_kwargs = dict(dimension_semantics=("parallel",))          # megacore on v7x
    if tile_m >= 512:
        cp_kwargs["vmem_limit_bytes"] = 48 * 1024 * 1024         # fits v7x's 64 MiB physical
    compiler_params = pltpu.CompilerParams(**cp_kwargs)

    recon_flat, feats = pl.pallas_call(
        _ae_kernel,
        out_shape=(
            jax.ShapeDtypeStruct((b_pad, IN_DIM), recon_dtype),
            jax.ShapeDtypeStruct((b_pad, FEAT_PAD), jnp.float32),
        ),
        grid=grid,
        in_specs=in_specs,
        out_specs=out_specs,
        compiler_params=compiler_params,
        cost_estimate=cost,
    )(x_flat, *kernel_args)

    recon = recon_flat[:batch].reshape(batch, 1, 28, 28)
    return recon, feats[:batch, :FEAT_DIM]


def _reference_forward(x_nchw, params):
    """Pure-JAX reference that mirrors the kernel's bf16-matmul / f32-accumulate path."""
    batch = x_nchw.shape[0]
    h = x_nchw.reshape(batch, -1)
    w1, b1, w2, b2, w3, b3, w4, b4, w5, b5, w6, b6 = params

    def dense(h, w, b):
        return jnp.dot(h.astype(jnp.bfloat16), w.astype(jnp.bfloat16),
                       preferred_element_type=jnp.float32) + b

    h = jnp.maximum(dense(h, w1, b1), 0.0)
    h = jnp.maximum(dense(h, w2, b2), 0.0)
    feat = jnp.maximum(dense(h, w3, b3), 0.0)
    h = jnp.maximum(dense(feat, w4, b4), 0.0)
    h = jnp.maximum(dense(h, w5, b5), 0.0)
    recon = jax.nn.sigmoid(dense(h, w6, b6))
    return recon.reshape(batch, 1, 28, 28), feat


if __name__ == "__main__":
    key = jax.random.PRNGKey(0)
    key_x, key_p = jax.random.split(key)

    params = init_params(key_p)

    # --- small MNIST-like batch, default (bf16 recon, single grid step) ---
    batch = 8
    x = jax.random.uniform(key_x, (batch, 1, 28, 28), jnp.float32)
    recon, feats = autoencoder_forward(x, params)
    jax.block_until_ready((recon, feats))

    ref_recon, ref_feats = _reference_forward(x, params)
    assert recon.shape == (batch, 1, 28, 28)
    assert feats.shape == (batch, FEAT_DIM)
    assert jnp.allclose(recon.astype(jnp.float32), ref_recon, atol=1e-2, rtol=1e-2)
    assert jnp.allclose(feats, ref_feats, atol=2e-3, rtol=2e-3)

    # --- batch with default tile selection (>= 2 grid steps + batch padding path) ---
    batch2 = 40
    x2 = jax.random.uniform(key_x, (batch2, 1, 28, 28), jnp.float32)
    recon2, feats2 = autoencoder_forward(x2, params)              # tile_m=32 -> grid=(2,)
    jax.block_until_ready((recon2, feats2))

    ref_recon2, ref_feats2 = _reference_forward(x2, params)
    assert recon2.shape == (batch2, 1, 28, 28)
    assert feats2.shape == (batch2, FEAT_DIM)
    assert jnp.allclose(recon2.astype(jnp.float32), ref_recon2, atol=1e-2, rtol=1e-2)
    assert jnp.allclose(feats2, ref_feats2, atol=2e-3, rtol=2e-3)

    # --- explicit tile override + f32 recon output (multi-step grid, tighter check) ---
    recon3, feats3 = autoencoder_forward(x2, params, tile_m=16,
                                         recon_dtype=jnp.float32)  # grid=(3,), 8 padded rows
    jax.block_until_ready((recon3, feats3))
    assert recon3.dtype == jnp.float32
    assert jnp.allclose(recon3, ref_recon2, atol=3e-3, rtol=3e-3)
    assert jnp.allclose(feats3, ref_feats2, atol=2e-3, rtol=2e-3)

    print("KERNEL_OK")
</pallas_src>

<mosaic_0001>
module attributes {stable_mosaic.version = 11 : i64} {
  func.func @_ae_kernel(%arg0: i32, %arg1: memref<16x784xf32, #tpu.memory_space<vmem>>, %arg2: memref<784x256xbf16, #tpu.memory_space<vmem>>, %arg3: memref<1x256xf32, #tpu.memory_space<vmem>>, %arg4: memref<256x64xbf16, #tpu.memory_space<vmem>>, %arg5: memref<1x64xf32, #tpu.memory_space<vmem>>, %arg6: memref<64x128xbf16, #tpu.memory_space<vmem>>, %arg7: memref<1x128xf32, #tpu.memory_space<vmem>>, %arg8: memref<128x64xbf16, #tpu.memory_space<vmem>>, %arg9: memref<1x64xf32, #tpu.memory_space<vmem>>, %arg10: memref<64x256xbf16, #tpu.memory_space<vmem>>, %arg11: memref<1x256xf32, #tpu.memory_space<vmem>>, %arg12: memref<256x784xbf16, #tpu.memory_space<vmem>>, %arg13: memref<1x784xf32, #tpu.memory_space<vmem>>, %arg14: memref<16x784xbf16, #tpu.memory_space<vmem>>, %arg15: memref<16x128xf32, #tpu.memory_space<vmem>>) attributes {dimension_semantics = [#tpu.dimension_semantics<parallel>], iteration_bounds = array<i64: 1>, scalar_prefetch = 0 : i64, scratch_operands = 0 : i64, tpu.core_type = #tpu.core_type<tc>, window_params = [{transform_indices = @transform_0, window_bounds = array<i64: 16, 784>}, {pipeline_mode = #tpu.pipeline_mode<synchronous>, transform_indices = @transform_1, window_bounds = array<i64: 784, 256>}, {pipeline_mode = #tpu.pipeline_mode<synchronous>, transform_indices = @transform_2, window_bounds = array<i64: 1, 256>}, {pipeline_mode = #tpu.pipeline_mode<synchronous>, transform_indices = @transform_3, window_bounds = array<i64: 256, 64>}, {pipeline_mode = #tpu.pipeline_mode<synchronous>, transform_indices = @transform_4, window_bounds = array<i64: 1, 64>}, {pipeline_mode = #tpu.pipeline_mode<synchronous>, transform_indices = @transform_5, window_bounds = array<i64: 64, 128>}, {pipeline_mode = #tpu.pipeline_mode<synchronous>, transform_indices = @transform_6, window_bounds = array<i64: 1, 128>}, {pipeline_mode = #tpu.pipeline_mode<synchronous>, transform_indices = @transform_7, window_bounds = array<i64: 128, 64>}, {pipeline_mode = #tpu.pipeline_mode<synchronous>, transform_indices = @transform_8, window_bounds = array<i64: 1, 64>}, {pipeline_mode = #tpu.pipeline_mode<synchronous>, transform_indices = @transform_9, window_bounds = array<i64: 64, 256>}, {pipeline_mode = #tpu.pipeline_mode<synchronous>, transform_indices = @transform_10, window_bounds = array<i64: 1, 256>}, {pipeline_mode = #tpu.pipeline_mode<synchronous>, transform_indices = @transform_11, window_bounds = array<i64: 256, 784>}, {pipeline_mode = #tpu.pipeline_mode<synchronous>, transform_indices = @transform_12, window_bounds = array<i64: 1, 784>}, {transform_indices = @transform_13, window_bounds = array<i64: 16, 784>}, {transform_indices = @transform_14, window_bounds = array<i64: 16, 128>}]} {
    %c0 = arith.constant 0 : index
    %c0_0 = arith.constant 0 : index
    %0 = vector.load %arg1[%c0, %c0_0] : memref<16x784xf32, #tpu.memory_space<vmem>>, vector<16x784xf32>
    %1 = arith.truncf %0 : vector<16x784xf32> to vector<16x784xbf16>
    %c0_1 = arith.constant 0 : index
    %c0_2 = arith.constant 0 : index
    %2 = vector.load %arg2[%c0_1, %c0_2] : memref<784x256xbf16, #tpu.memory_space<vmem>>, vector<784x256xbf16>
    %cst = arith.constant dense<0.000000e+00> : vector<16x256xf32>
    %3 = tpu.matmul %1, %2, %cst {dimension_numbers = #tpu.dot_dimension_numbers<[1], [0], [0], [1], [0, 0, 1, 1], [], []>} : vector<16x784xbf16>, vector<784x256xbf16>, vector<16x256xf32> -> vector<16x256xf32>
    %c0_3 = arith.constant 0 : index
    %c0_4 = arith.constant 0 : index
    %4 = vector.load %arg3[%c0_3, %c0_4] : memref<1x256xf32, #tpu.memory_space<vmem>>, vector<1x256xf32>
    %5 = vector.broadcast %4 : vector<1x256xf32> to vector<16x256xf32>
    %6 = arith.addf %3, %5 : vector<16x256xf32>
    %cst_5 = arith.constant 0.000000e+00 : f32
    %7 = vector.broadcast %cst_5 : f32 to vector<16x256xf32>
    %8 = arith.maximumf %6, %7 : vector<16x256xf32>
    %9 = arith.truncf %8 : vector<16x256xf32> to vector<16x256xbf16>
    %c0_6 = arith.constant 0 : index
    %c0_7 = arith.constant 0 : index
    %10 = vector.load %arg4[%c0_6, %c0_7] : memref<256x64xbf16, #tpu.memory_space<vmem>>, vector<256x64xbf16>
    %cst_8 = arith.constant dense<0.000000e+00> : vector<16x64xf32>
    %11 = tpu.matmul %9, %10, %cst_8 {dimension_numbers = #tpu.dot_dimension_numbers<[1], [0], [0], [1], [0, 0, 1, 1], [], []>} : vector<16x256xbf16>, vector<256x64xbf16>, vector<16x64xf32> -> vector<16x64xf32>
    %c0_9 = arith.constant 0 : index
    %c0_10 = arith.constant 0 : index
    %12 = vector.load %arg5[%c0_9, %c0_10] : memref<1x64xf32, #tpu.memory_space<vmem>>, vector<1x64xf32>
    %13 = vector.broadcast %12 : vector<1x64xf32> to vector<16x64xf32>
    %14 = arith.addf %11, %13 : vector<16x64xf32>
    %cst_11 = arith.constant 0.000000e+00 : f32
    %15 = vector.broadcast %cst_11 : f32 to vector<16x64xf32>
    %16 = arith.maximumf %14, %15 : vector<16x64xf32>
    %17 = arith.truncf %16 : vector<16x64xf32> to vector<16x64xbf16>
    %c0_12 = arith.constant 0 : index
    %c0_13 = arith.constant 0 : index
    %18 = vector.load %arg6[%c0_12, %c0_13] : memref<64x128xbf16, #tpu.memory_space<vmem>>, vector<64x128xbf16>
    %cst_14 = arith.constant dense<0.000000e+00> : vector<16x128xf32>
    %19 = tpu.matmul %17, %18, %cst_14 {dimension_numbers = #tpu.dot_dimension_numbers<[1], [0], [0], [1], [0, 0, 1, 1], [], []>} : vector<16x64xbf16>, vector<64x128xbf16>, vector<16x128xf32> -> vector<16x128xf32>
    %c0_15 = arith.constant 0 : index
    %c0_16 = arith.constant 0 : index
    %20 = vector.load %arg7[%c0_15, %c0_16] : memref<1x128xf32, #tpu.memory_space<vmem>>, vector<1x128xf32>
    %21 = vector.broadcast %20 : vector<1x128xf32> to vector<16x128xf32>
    %22 = arith.addf %19, %21 : vector<16x128xf32>
    %cst_17 = arith.constant 0.000000e+00 : f32
    %23 = vector.broadcast %cst_17 : f32 to vector<16x128xf32>
    %24 = arith.maximumf %22, %23 : vector<16x128xf32>
    %c0_18 = arith.constant 0 : index
    %c0_19 = arith.constant 0 : index
    %25 = vector.load %arg15[%c0_18, %c0_19] : memref<16x128xf32, #tpu.memory_space<vmem>>, vector<16x128xf32>
    tpu.vector_store %arg15[%c0_18, %c0_19], %24 {strides = array<i32>} : memref<16x128xf32, #tpu.memory_space<vmem>>, vector<16x128xf32>,
    %26 = arith.truncf %24 : vector<16x128xf32> to vector<16x128xbf16>
    %c0_20 = arith.constant 0 : index
    %c0_21 = arith.constant 0 : index
    %27 = vector.load %arg8[%c0_20, %c0_21] : memref<128x64xbf16, #tpu.memory_space<vmem>>, vector<128x64xbf16>
    %cst_22 = arith.constant dense<0.000000e+00> : vector<16x64xf32>
    %28 = tpu.matmul %26, %27, %cst_22 {dimension_numbers = #tpu.dot_dimension_numbers<[1], [0], [0], [1], [0, 0, 1, 1], [], []>} : vector<16x128xbf16>, vector<128x64xbf16>, vector<16x64xf32> -> vector<16x64xf32>
    %c0_23 = arith.constant 0 : index
    %c0_24 = arith.constant 0 : index
    %29 = vector.load %arg9[%c0_23, %c0_24] : memref<1x64xf32, #tpu.memory_space<vmem>>, vector<1x64xf32>
    %30 = vector.broadcast %29 : vector<1x64xf32> to vector<16x64xf32>
    %31 = arith.addf %28, %30 : vector<16x64xf32>
    %cst_25 = arith.constant 0.000000e+00 : f32
    %32 = vector.broadcast %cst_25 : f32 to vector<16x64xf32>
    %33 = arith.maximumf %31, %32 : vector<16x64xf32>
    %34 = arith.truncf %33 : vector<16x64xf32> to vector<16x64xbf16>
    %c0_26 = arith.constant 0 : index
    %c0_27 = arith.constant 0 : index
    %35 = vector.load %arg10[%c0_26, %c0_27] : memref<64x256xbf16, #tpu.memory_space<vmem>>, vector<64x256xbf16>
    %cst_28 = arith.constant dense<0.000000e+00> : vector<16x256xf32>
    %36 = tpu.matmul %34, %35, %cst_28 {dimension_numbers = #tpu.dot_dimension_numbers<[1], [0], [0], [1], [0, 0, 1, 1], [], []>} : vector<16x64xbf16>, vector<64x256xbf16>, vector<16x256xf32> -> vector<16x256xf32>
    %c0_29 = arith.constant 0 : index
    %c0_30 = arith.constant 0 : index
    %37 = vector.load %arg11[%c0_29, %c0_30] : memref<1x256xf32, #tpu.memory_space<vmem>>, vector<1x256xf32>
    %38 = vector.broadcast %37 : vector<1x256xf32> to vector<16x256xf32>
    %39 = arith.addf %36, %38 : vector<16x256xf32>
    %cst_31 = arith.constant 0.000000e+00 : f32
    %40 = vector.broadcast %cst_31 : f32 to vector<16x256xf32>
    %41 = arith.maximumf %39, %40 : vector<16x256xf32>
    %42 = arith.truncf %41 : vector<16x256xf32> to vector<16x256xbf16>
    %c0_32 = arith.constant 0 : index
    %c0_33 = arith.constant 0 : index
    %43 = vector.load %arg12[%c0_32, %c0_33] : memref<256x784xbf16, #tpu.memory_space<vmem>>, vector<256x784xbf16>
    %cst_34 = arith.constant dense<0.000000e+00> : vector<16x784xf32>
    %44 = tpu.matmul %42, %43, %cst_34 {dimension_numbers = #tpu.dot_dimension_numbers<[1], [0], [0], [1], [0, 0, 1, 1], [], []>} : vector<16x256xbf16>, vector<256x784xbf16>, vector<16x784xf32> -> vector<16x784xf32>
    %c0_35 = arith.constant 0 : index
    %c0_36 = arith.constant 0 : index
    %45 = vector.load %arg13[%c0_35, %c0_36] : memref<1x784xf32, #tpu.memory_space<vmem>>, vector<1x784xf32>
    %46 = vector.broadcast %45 : vector<1x784xf32> to vector<16x784xf32>
    %47 = arith.addf %44, %46 : vector<16x784xf32>
    %cst_37 = arith.constant 0.000000e+00 : f32
    %48 = vector.broadcast %cst_37 : f32 to vector<16x784xf32>
    %49 = arith.subf %48, %47 : vector<16x784xf32>
    %50 = math.exp %49 : vector<16x784xf32>
    %cst_38 = arith.constant 1.000000e+00 : f32
    %51 = vector.broadcast %cst_38 : f32 to vector<16x784xf32>
    %52 = arith.addf %51, %50 : vector<16x784xf32>
    %53 = tpu.reciprocal %52 {approx = true} : vector<16x784xf32> -> vector<16x784xf32>
    %54 = arith.truncf %53 : vector<16x784xf32> to vector<16x784xbf16>
    %c0_39 = arith.constant 0 : index
    %c0_40 = arith.constant 0 : index
    %55 = vector.load %arg14[%c0_39, %c0_40] : memref<16x784xbf16, #tpu.memory_space<vmem>>, vector<16x784xbf16>
    tpu.vector_store %arg14[%c0_39, %c0_40], %54 {strides = array<i32>} : memref<16x784xbf16, #tpu.memory_space<vmem>>, vector<16x784xbf16>,
    return
  }
  func.func @transform_0(%arg0: i32) -> (i32, i32) {
    %c0_i32 = arith.constant 0 : i32
    %c0_i32_0 = arith.constant 0 : i32
    return %arg0, %c0_i32 : i32, i32
  }
  func.func @transform_1(%arg0: i32) -> (i32, i32) {
    %c0_i32 = arith.constant 0 : i32
    %c0_i32_0 = arith.constant 0 : i32
    %c0_i32_1 = arith.constant 0 : i32
    return %c0_i32, %c0_i32_0 : i32, i32
  }
  func.func @transform_2(%arg0: i32) -> (i32, i32) {
    %c0_i32 = arith.constant 0 : i32
    %c0_i32_0 = arith.constant 0 : i32
    %c0_i32_1 = arith.constant 0 : i32
    return %c0_i32, %c0_i32_0 : i32, i32
  }
  func.func @transform_3(%arg0: i32) -> (i32, i32) {
    %c0_i32 = arith.constant 0 : i32
    %c0_i32_0 = arith.constant 0 : i32
    %c0_i32_1 = arith.constant 0 : i32
    return %c0_i32, %c0_i32_0 : i32, i32
  }
  func.func @transform_4(%arg0: i32) -> (i32, i32) {
    %c0_i32 = arith.constant 0 : i32
    %c0_i32_0 = arith.constant 0 : i32
    %c0_i32_1 = arith.constant 0 : i32
    return %c0_i32, %c0_i32_0 : i32, i32
  }
  func.func @transform_5(%arg0: i32) -> (i32, i32) {
    %c0_i32 = arith.constant 0 : i32
    %c0_i32_0 = arith.constant 0 : i32
    %c0_i32_1 = arith.constant 0 : i32
    return %c0_i32, %c0_i32_0 : i32, i32
  }
  func.func @transform_6(%arg0: i32) -> (i32, i32) {
    %c0_i32 = arith.constant 0 : i32
    %c0_i32_0 = arith.constant 0 : i32
    %c0_i32_1 = arith.constant 0 : i32
    return %c0_i32, %c0_i32_0 : i32, i32
  }
  func.func @transform_7(%arg0: i32) -> (i32, i32) {
    %c0_i32 = arith.constant 0 : i32
    %c0_i32_0 = arith.constant 0 : i32
    %c0_i32_1 = arith.constant 0 : i32
    return %c0_i32, %c0_i32_0 : i32, i32
  }
  func.func @transform_8(%arg0: i32) -> (i32, i32) {
    %c0_i32 = arith.constant 0 : i32
    %c0_i32_0 = arith.constant 0 : i32
    %c0_i32_1 = arith.constant 0 : i32
    return %c0_i32, %c0_i32_0 : i32, i32
  }
  func.func @transform_9(%arg0: i32) -> (i32, i32) {
    %c0_i32 = arith.constant 0 : i32
    %c0_i32_0 = arith.constant 0 : i32
    %c0_i32_1 = arith.constant 0 : i32
    return %c0_i32, %c0_i32_0 : i32, i32
  }
  func.func @transform_10(%arg0: i32) -> (i32, i32) {
    %c0_i32 = arith.constant 0 : i32
    %c0_i32_0 = arith.constant 0 : i32
    %c0_i32_1 = arith.constant 0 : i32
    return %c0_i32, %c0_i32_0 : i32, i32
  }
  func.func @transform_11(%arg0: i32) -> (i32, i32) {
    %c0_i32 = arith.constant 0 : i32
    %c0_i32_0 = arith.constant 0 : i32
    %c0_i32_1 = arith.constant 0 : i32
    return %c0_i32, %c0_i32_0 : i32, i32
  }
  func.func @transform_12(%arg0: i32) -> (i32, i32) {
    %c0_i32 = arith.constant 0 : i32
    %c0_i32_0 = arith.constant 0 : i32
    %c0_i32_1 = arith.constant 0 : i32
    return %c0_i32, %c0_i32_0 : i32, i32
  }
  func.func @transform_13(%arg0: i32) -> (i32, i32) {
    %c0_i32 = arith.constant 0 : i32
    %c0_i32_0 = arith.constant 0 : i32
    return %arg0, %c0_i32 : i32, i32
  }
  func.func @transform_14(%arg0: i32) -> (i32, i32) {
    %c0_i32 = arith.constant 0 : i32
    %c0_i32_0 = arith.constant 0 : i32
    return %arg0, %c0_i32 : i32, i32
  }
}

</mosaic_0001>

<llo_original>
// kernel: autoencoder_forward.1
$region0: #{autoencoder_forward.1}
  #allocation0 [shape = 'u32[]', space=smem, size = 0x4, offset = 0x4, fixed_abs, tag = 'smem constant byte address 0x4 - core index']
  #allocation1 [shape = 'u32[144,128]{1,0:T(1,128)}', space=vmem, size = 0x12000, scoped, tag = 'internal scratch']
  %s0 = inlined_call_operand.vmem [shape: f32[16,784], index: 0, kind: input, shape index: {}]
  %s1 = inlined_call_operand.vmem [shape: bf16[784,256], index: 1, kind: input, shape index: {}]
  %s2 = inlined_call_operand.vmem [shape: f32[1,256], index: 2, kind: input, shape index: {}]
  %s3 = inlined_call_operand.vmem [shape: bf16[256,64], index: 3, kind: input, shape index: {}]
  %s4 = inlined_call_operand.vmem [shape: f32[1,64], index: 4, kind: input, shape index: {}]
  %s5 = inlined_call_operand.vmem [shape: bf16[64,128], index: 5, kind: input, shape index: {}]
  %s6 = inlined_call_operand.vmem [shape: f32[1,128], index: 6, kind: input, shape index: {}]
  %s7 = inlined_call_operand.vmem [shape: bf16[128,64], index: 7, kind: input, shape index: {}]
  %s8 = inlined_call_operand.vmem [shape: f32[1,64], index: 8, kind: input, shape index: {}]
  %s9 = inlined_call_operand.vmem [shape: bf16[64,256], index: 9, kind: input, shape index: {}]
  %s10 = inlined_call_operand.vmem [shape: f32[1,256], index: 10, kind: input, shape index: {}]
  %s11 = inlined_call_operand.vmem [shape: bf16[256,784], index: 11, kind: input, shape index: {}]
  %s12 = inlined_call_operand.vmem [shape: f32[1,784], index: 12, kind: input, shape index: {}]
  %s13 = inlined_call_operand.vmem [shape: bf16[16,784], index: 13, kind: output, shape index: {0}]
  %s14 = inlined_call_operand.vmem [shape: f32[16,128], index: 14, kind: output, shape index: {1}]
  %15 = xla_tuple %s13, %s14
  %s16 = sld [smem:[#allocation0]]
  $region70: #{autoencoder_forward.1} parent=0
    _
  %s18 = ssub.s32 1, %s16
  %s19 = scalar_select 0, %s18, %s16
  // Predicated region
  $region2: #{autoencoder_forward.1} parent=0 // pred_check
    _
  $region3: #{autoencoder_forward.1} parent=0 // pred_check_branch
    %21 = sbr.rel (0) target = $region5
  $region4: #{autoencoder_forward.1} parent=0 // pred_region
    _
  $region5: #{autoencoder_forward.1} parent=0 // pred_fallthru
    _
  // Predicated region
  $region6: #{autoencoder_forward.1} parent=0 // pred_check
    _
  $region7: #{autoencoder_forward.1} parent=0 // pred_check_branch
    %23 = sbr.rel (0) target = $region9
  $region8: #{autoencoder_forward.1} parent=0 // pred_region
    _
  $region9: #{autoencoder_forward.1} parent=0 // pred_fallthru
    _
  // Predicated region
  $region10: #{autoencoder_forward.1} parent=0 // pred_check
    _
  $region11: #{autoencoder_forward.1} parent=0 // pred_check_branch
    %25 = sbr.rel (0) target = $region13
  $region12: #{autoencoder_forward.1} parent=0 // pred_region
    _
  $region13: #{autoencoder_forward.1} parent=0 // pred_fallthru
    _
  // Predicated region
  $region14: #{autoencoder_forward.1} parent=0 // pred_check
    _
  $region15: #{autoencoder_forward.1} parent=0 // pred_check_branch
    %27 = sbr.rel (0) target = $region17
  $region16: #{autoencoder_forward.1} parent=0 // pred_region
    _
  $region17: #{autoencoder_forward.1} parent=0 // pred_fallthru
    _
  // Predicated region
  $region18: #{autoencoder_forward.1} parent=0 // pred_check
    _
  $region19: #{autoencoder_forward.1} parent=0 // pred_check_branch
    %29 = sbr.rel (0) target = $region21
  $region20: #{autoencoder_forward.1} parent=0 // pred_region
    _
  $region21: #{autoencoder_forward.1} parent=0 // pred_fallthru
    _
  // Predicated region
  $region22: #{autoencoder_forward.1} parent=0 // pred_check
    _
  $region23: #{autoencoder_forward.1} parent=0 // pred_check_branch
    %31 = sbr.rel (0) target = $region25
  $region24: #{autoencoder_forward.1} parent=0 // pred_region
    _
  $region25: #{autoencoder_forward.1} parent=0 // pred_fallthru
    _
  // Predicated region
  $region26: #{autoencoder_forward.1} parent=0 // pred_check
    _
  $region27: #{autoencoder_forward.1} parent=0 // pred_check_branch
    %33 = sbr.rel (0) target = $region29
  $region28: #{autoencoder_forward.1} parent=0 // pred_region
    _
  $region29: #{autoencoder_forward.1} parent=0 // pred_fallthru
    _
  // Predicated region
  $region30: #{autoencoder_forward.1} parent=0 // pred_check
    _
  $region31: #{autoencoder_forward.1} parent=0 // pred_check_branch
    %35 = sbr.rel (0) target = $region33
  $region32: #{autoencoder_forward.1} parent=0 // pred_region
    _
  $region33: #{autoencoder_forward.1} parent=0 // pred_fallthru
    _
  // Predicated region
  $region34: #{autoencoder_forward.1} parent=0 // pred_check
    _
  $region35: #{autoencoder_forward.1} parent=0 // pred_check_branch
    %37 = sbr.rel (0) target = $region37
  $region36: #{autoencoder_forward.1} parent=0 // pred_region
    _
  $region37: #{autoencoder_forward.1} parent=0 // pred_fallthru
    _
  // Predicated region
  $region38: #{autoencoder_forward.1} parent=0 // pred_check
    _
  $region39: #{autoencoder_forward.1} parent=0 // pred_check_branch
    %39 = sbr.rel (0) target = $region41
  $region40: #{autoencoder_forward.1} parent=0 // pred_region
    _
  $region41: #{autoencoder_forward.1} parent=0 // pred_fallthru
    _
  // Predicated region
  $region42: #{autoencoder_forward.1} parent=0 // pred_check
    _
  $region43: #{autoencoder_forward.1} parent=0 // pred_check_branch
    %41 = sbr.rel (0) target = $region45
  $region44: #{autoencoder_forward.1} parent=0 // pred_region
    _
  $region45: #{autoencoder_forward.1} parent=0 // pred_fallthru
    _
  // Predicated region
  $region46: #{autoencoder_forward.1} parent=0 // pred_check
    _
  $region47: #{autoencoder_forward.1} parent=0 // pred_check_branch
    %43 = sbr.rel (0) target = $region49
  $region48: #{autoencoder_forward.1} parent=0 // pred_region
    _
  $region49: #{autoencoder_forward.1} parent=0 // pred_fallthru
    _
  // Predicated region
  $region50: #{autoencoder_forward.1} parent=0 // pred_check
    _
  $region51: #{autoencoder_forward.1} parent=0 // pred_check_branch
    %45 = sbr.rel (0) target = $region53
  $region52: #{autoencoder_forward.1} parent=0 // pred_region
    _
  $region53: #{autoencoder_forward.1} parent=0 // pred_fallthru
    _
  %v47 = vld [vmem:[%s0] sm:$0xff]
  %v48 = vld [vmem:[%s0 + $0x8] sm:$0xff]
  %v49 = vld [vmem:[%s0 + $0x10] sm:$0xff]
  %v50 = vld [vmem:[%s0 + $0x18] sm:$0xff]
  %v51 = vld [vmem:[%s0 + $0x20] sm:$0xff]
  %v52 = vld [vmem:[%s0 + $0x28] sm:$0xff]
  %v53 = vld [vmem:[%s0 + $0x30] sm:$0xff]
  %v54 = vld [vmem:[%s0 + $0x38] sm:$0xff]
  %v55 = vld [vmem:[%s0 + $0x40] sm:$0xff]
  %v56 = vld [vmem:[%s0 + $0x48] sm:$0xff]
  %v57 = vld [vmem:[%s0 + $0x50] sm:$0xff]
  %v58 = vld [vmem:[%s0 + $0x58] sm:$0xff]
  %v59 = vld [vmem:[%s0 + $0x60] sm:$0xff]
  %v60 = vld [vmem:[%s0 + $0x68] sm:$0xff]
  %v61 = vpack.c.bf16 %v54, %v47
  %v62 = vpack.c.bf16 %v55, %v48
  %v63 = vpack.c.bf16 %v56, %v49
  %v64 = vpack.c.bf16 %v57, %v50
  %v65 = vpack.c.bf16 %v58, %v51
  %v66 = vpack.c.bf16 %v59, %v52
  %v67 = vpack.c.bf16 %v60, %v53
  %v68 = vld [vmem:[%s1] sm:$0xff]
  %v69 = vld [vmem:[%s1 + $0x8] sm:$0xff]
  %v70 = vld [vmem:[%s1 + $0x10] sm:$0xff]
  %v71 = vld [vmem:[%s1 + $0x18] sm:$0xff]
  %v72 = vld [vmem:[%s1 + $0x20] sm:$0xff]
  %v73 = vld [vmem:[%s1 + $0x28] sm:$0xff]
  %v74 = vld [vmem:[%s1 + $0x30] sm:$0xff]
  %v75 = vld [vmem:[%s1 + $0x38] sm:$0xff]
  %v76 = vld [vmem:[%s1 + $0x40] sm:$0xff]
  %v77 = vld [vmem:[%s1 + $0x48] sm:$0xff]
  %v78 = vld [vmem:[%s1 + $0x50] sm:$0xff]
  %v79 = vld [vmem:[%s1 + $0x58] sm:$0xff]
  %v80 = vld [vmem:[%s1 + $0x60] sm:$0xff]
  %v81 = vld [vmem:[%s1 + $0x68] sm:$0xff]
  %v82 = vld [vmem:[%s1 + $0x70] sm:$0xff]
  %v83 = vld [vmem:[%s1 + $0x78] sm:$0xff]
  %v84 = vld [vmem:[%s1 + $0x80] sm:$0xff]
  %v85 = vld [vmem:[%s1 + $0x88] sm:$0xff]
  %v86 = vld [vmem:[%s1 + $0x90] sm:$0xff]
  %v87 = vld [vmem:[%s1 + $0x98] sm:$0xff]
  %v88 = vld [vmem:[%s1 + $0xa0] sm:$0xff]
  %v89 = vld [vmem:[%s1 + $0xa8] sm:$0xff]
  %v90 = vld [vmem:[%s1 + $0xb0] sm:$0xff]
  %v91 = vld [vmem:[%s1 + $0xb8] sm:$0xff]
  %v92 = vld [vmem:[%s1 + $0xc0] sm:$0xff]
  %v93 = vld [vmem:[%s1 + $0xc8] sm:$0xff]
  %v94 = vld [vmem:[%s1 + $0xd0] sm:$0xff]
  %v95 = vld [vmem:[%s1 + $0xd8] sm:$0xff]
  %v96 = vld [vmem:[%s1 + $0xe0] sm:$0xff]
  %v97 = vld [vmem:[%s1 + $0xe8] sm:$0xff]
  %v98 = vld [vmem:[%s1 + $0xf0] sm:$0xff]
  %v99 = vld [vmem:[%s1 + $0xf8] sm:$0xff]
  %v100 = vld [vmem:[%s1 + $0x100] sm:$0xff]
  %v101 = vld [vmem:[%s1 + $0x108] sm:$0xff]
  %v102 = vld [vmem:[%s1 + $0x110] sm:$0xff]
  %v103 = vld [vmem:[%s1 + $0x118] sm:$0xff]
  %v104 = vld [vmem:[%s1 + $0x120] sm:$0xff]
  %v105 = vld [vmem:[%s1 + $0x128] sm:$0xff]
  %v106 = vld [vmem:[%s1 + $0x130] sm:$0xff]
  %v107 = vld [vmem:[%s1 + $0x138] sm:$0xff]
  %v108 = vld [vmem:[%s1 + $0x140] sm:$0xff]
  %v109 = vld [vmem:[%s1 + $0x148] sm:$0xff]
  %v110 = vld [vmem:[%s1 + $0x150] sm:$0xff]
  %v111 = vld [vmem:[%s1 + $0x158] sm:$0xff]
  %v112 = vld [vmem:[%s1 + $0x160] sm:$0xff]
  %v113 = vld [vmem:[%s1 + $0x168] sm:$0xff]
  %v114 = vld [vmem:[%s1 + $0x170] sm:$0xff]
  %v115 = vld [vmem:[%s1 + $0x178] sm:$0xff]
  %v116 = vld [vmem:[%s1 + $0x180] sm:$0xff]
  %v117 = vld [vmem:[%s1 + $0x188] sm:$0xff]
  %v118 = vld [vmem:[%s1 + $0x190] sm:$0xff]
  %v119 = vld [vmem:[%s1 + $0x198] sm:$0xff]
  %v120 = vld [vmem:[%s1 + $0x1a0] sm:$0xff]
  %v121 = vld [vmem:[%s1 + $0x1a8] sm:$0xff]
  %v122 = vld [vmem:[%s1 + $0x1b0] sm:$0xff]
  %v123 = vld [vmem:[%s1 + $0x1b8] sm:$0xff]
  %v124 = vld [vmem:[%s1 + $0x1c0] sm:$0xff]
  %v125 = vld [vmem:[%s1 + $0x1c8] sm:$0xff]
  %v126 = vld [vmem:[%s1 + $0x1d0] sm:$0xff]
  %v127 = vld [vmem:[%s1 + $0x1d8] sm:$0xff]
  %v128 = vld [vmem:[%s1 + $0x1e0] sm:$0xff]
  %v129 = vld [vmem:[%s1 + $0x1e8] sm:$0xff]
  %v130 = vld [vmem:[%s1 + $0x1f0] sm:$0xff]
  %v131 = vld [vmem:[%s1 + $0x1f8] sm:$0xff]
  %v132 = vld [vmem:[%s1 + $0x200] sm:$0xff]
  %v133 = vld [vmem:[%s1 + $0x208] sm:$0xff]
  %v134 = vld [vmem:[%s1 + $0x210] sm:$0xff]
  %v135 = vld [vmem:[%s1 + $0x218] sm:$0xff]
  %v136 = vld [vmem:[%s1 + $0x220] sm:$0xff]
  %v137 = vld [vmem:[%s1 + $0x228] sm:$0xff]
  %v138 = vld [vmem:[%s1 + $0x230] sm:$0xff]
  %v139 = vld [vmem:[%s1 + $0x238] sm:$0xff]
  %v140 = vld [vmem:[%s1 + $0x240] sm:$0xff]
  %v141 = vld [vmem:[%s1 + $0x248] sm:$0xff]
  %v142 = vld [vmem:[%s1 + $0x250] sm:$0xff]
  %v143 = vld [vmem:[%s1 + $0x258] sm:$0xff]
  %v144 = vld [vmem:[%s1 + $0x260] sm:$0xff]
  %v145 = vld [vmem:[%s1 + $0x268] sm:$0xff]
  %v146 = vld [vmem:[%s1 + $0x270] sm:$0xff]
  %v147 = vld [vmem:[%s1 + $0x278] sm:$0xff]
  %v148 = vld [vmem:[%s1 + $0x280] sm:$0xff]
  %v149 = vld [vmem:[%s1 + $0x288] sm:$0xff]
  %v150 = vld [vmem:[%s1 + $0x290] sm:$0xff]
  %v151 = vld [vmem:[%s1 + $0x298] sm:$0xff]
  %v152 = vld [vmem:[%s1 + $0x2a0] sm:$0xff]
  %v153 = vld [vmem:[%s1 + $0x2a8] sm:$0xff]
  %v154 = vld [vmem:[%s1 + $0x2b0] sm:$0xff]
  %v155 = vld [vmem:[%s1 + $0x2b8] sm:$0xff]
  %v156 = vld [vmem:[%s1 + $0x2c0] sm:$0xff]
  %v157 = vld [vmem:[%s1 + $0x2c8] sm:$0xff]
  %v158 = vld [vmem:[%s1 + $0x2d0] sm:$0xff]
  %v159 = vld [vmem:[%s1 + $0x2d8] sm:$0xff]
  %v160 = vld [vmem:[%s1 + $0x2e0] sm:$0xff]
  %v161 = vld [vmem:[%s1 + $0x2e8] sm:$0xff]
  %v162 = vld [vmem:[%s1 + $0x2f0] sm:$0xff]
  %v163 = vld [vmem:[%s1 + $0x2f8] sm:$0xff]
  %v164 = vld [vmem:[%s1 + $0x300] sm:$0xff]
  %v165 = vld [vmem:[%s1 + $0x308] sm:$0xff]
  %v166 = vld [vmem:[%s2] sm:$0x3]
  %v168 = vlaneseq
  %v169 = vshrl.u32 %v168, 7
  %v170 = vsub.s32 0, %v169
  %v171 = vrot.slane %v166, %v170
  %v172 = vlaneseq
  %v173 = vshrl.u32 %v172, 7
  %v174 = vsub.s32 1, %v173
  %v175 = vrot.slane %v166, %v174
  %v276 = vunpack.c.l.b16 %v68
  %v277 = vunpack.c.h.b16 %v68
  %v278 = vunpack.c.l.b16 %v69
  %v279 = vunpack.c.h.b16 %v69
  %v280 = vunpack.c.l.b16 %v70
  %v281 = vunpack.c.h.b16 %v70
  %v282 = vunpack.c.l.b16 %v71
  %v283 = vunpack.c.h.b16 %v71
  %v284 = vunpack.c.l.b16 %v72
  %v285 = vunpack.c.h.b16 %v72
  %v286 = vunpack.c.l.b16 %v73
  %v287 = vunpack.c.h.b16 %v73
  %v288 = vunpack.c.l.b16 %v74
  %v289 = vunpack.c.h.b16 %v74
  %v290 = vunpack.c.l.b16 %v75
  %v291 = vunpack.c.h.b16 %v75
  %v292 = vunpack.c.l.b16 %v76
  %v293 = vunpack.c.h.b16 %v76
  %v294 = vunpack.c.l.b16 %v77
  %v295 = vunpack.c.h.b16 %v77
  %v296 = vunpack.c.l.b16 %v78
  %v297 = vunpack.c.h.b16 %v78
  %v298 = vunpack.c.l.b16 %v79
  %v299 = vunpack.c.h.b16 %v79
  %v300 = vunpack.c.l.b16 %v80
  %v301 = vunpack.c.h.b16 %v80
  %v302 = vunpack.c.l.b16 %v81
  %v303 = vunpack.c.h.b16 %v81
  %v304 = vunpack.c.l.b16 %v82
  %v305 = vunpack.c.h.b16 %v82
  %v306 = vunpack.c.l.b16 %v83
  %v307 = vunpack.c.h.b16 %v83
  %v308 = vunpack.c.l.b16 %v84
  %v309 = vunpack.c.h.b16 %v84
  %v310 = vunpack.c.l.b16 %v85
  %v311 = vunpack.c.h.b16 %v85
  %v312 = vunpack.c.l.b16 %v86
  %v313 = vunpack.c.h.b16 %v86
  %v314 = vunpack.c.l.b16 %v87
  %v315 = vunpack.c.h.b16 %v87
  %v316 = vunpack.c.l.b16 %v88
  %v317 = vunpack.c.h.b16 %v88
  %v318 = vunpack.c.l.b16 %v89
  %v319 = vunpack.c.h.b16 %v89
  %v320 = vunpack.c.l.b16 %v90
  %v321 = vunpack.c.h.b16 %v90
  %v322 = vunpack.c.l.b16 %v91
  %v323 = vunpack.c.h.b16 %v91
  %v324 = vunpack.c.l.b16 %v92
  %v325 = vunpack.c.h.b16 %v92
  %v326 = vunpack.c.l.b16 %v93
  %v327 = vunpack.c.h.b16 %v93
  %v328 = vunpack.c.l.b16 %v94
  %v329 = vunpack.c.h.b16 %v94
  %v330 = vunpack.c.l.b16 %v95
  %v331 = vunpack.c.h.b16 %v95
  %v332 = vunpack.c.l.b16 %v96
  %v333 = vunpack.c.h.b16 %v96
  %v334 = vunpack.c.l.b16 %v97
  %v335 = vunpack.c.h.b16 %v97
  %v336 = vunpack.c.l.b16 %v98
  %v337 = vunpack.c.h.b16 %v98
  %v338 = vunpack.c.l.b16 %v99
  %v339 = vunpack.c.h.b16 %v99
  %v340 = vunpack.c.l.b16 %v100
  %v341 = vunpack.c.h.b16 %v100
  %v342 = vunpack.c.l.b16 %v101
  %v343 = vunpack.c.h.b16 %v101
  %v344 = vunpack.c.l.b16 %v102
  %v345 = vunpack.c.h.b16 %v102
  %v346 = vunpack.c.l.b16 %v103
  %v347 = vunpack.c.h.b16 %v103
  %v348 = vunpack.c.l.b16 %v104
  %v349 = vunpack.c.h.b16 %v104
  %v350 = vunpack.c.l.b16 %v105
  %v351 = vunpack.c.h.b16 %v105
  %v352 = vunpack.c.l.b16 %v106
  %v353 = vunpack.c.h.b16 %v106
  %v354 = vunpack.c.l.b16 %v107
  %v355 = vunpack.c.h.b16 %v107
  %v356 = vunpack.c.l.b16 %v108
  %v357 = vunpack.c.h.b16 %v108
  %v358 = vunpack.c.l.b16 %v109
  %v359 = vunpack.c.h.b16 %v109
  %v360 = vunpack.c.l.b16 %v110
  %v361 = vunpack.c.h.b16 %v110
  %v362 = vunpack.c.l.b16 %v111
  %v363 = vunpack.c.h.b16 %v111
  %v364 = vunpack.c.l.b16 %v112
  %v365 = vunpack.c.h.b16 %v112
  %v366 = vunpack.c.l.b16 %v113
  %v367 = vunpack.c.h.b16 %v113
  %v368 = vunpack.c.l.b16 %v114
  %v369 = vunpack.c.h.b16 %v114
  %v370 = vunpack.c.l.b16 %v115
  %v371 = vunpack.c.h.b16 %v115
  %v372 = vunpack.c.l.b16 %v116
  %v373 = vunpack.c.h.b16 %v116
  %v374 = vunpack.c.l.b16 %v117
  %v375 = vunpack.c.h.b16 %v117
  %v376 = vunpack.c.l.b16 %v118
  %v377 = vunpack.c.h.b16 %v118
  %v378 = vunpack.c.l.b16 %v119
  %v379 = vunpack.c.h.b16 %v119
  %v380 = vunpack.c.l.b16 %v120
  %v381 = vunpack.c.h.b16 %v120
  %v382 = vunpack.c.l.b16 %v121
  %v383 = vunpack.c.h.b16 %v121
  %v384 = vunpack.c.l.b16 %v122
  %v385 = vunpack.c.h.b16 %v122
  %v386 = vunpack.c.l.b16 %v123
  %v387 = vunpack.c.h.b16 %v123
  %v388 = vunpack.c.l.b16 %v124
  %v389 = vunpack.c.h.b16 %v124
  %v390 = vunpack.c.l.b16 %v125
  %v391 = vunpack.c.h.b16 %v125
  %v392 = vunpack.c.l.b16 %v126
  %v393 = vunpack.c.h.b16 %v126
  %v394 = vunpack.c.l.b16 %v127
  %v395 = vunpack.c.h.b16 %v127
  %v396 = vunpack.c.l.b16 %v128
  %v397 = vunpack.c.h.b16 %v128
  %v398 = vunpack.c.l.b16 %v129
  %v399 = vunpack.c.h.b16 %v129
  %v400 = vunpack.c.l.b16 %v130
  %v401 = vunpack.c.h.b16 %v130
  %v402 = vunpack.c.l.b16 %v131
  %v403 = vunpack.c.h.b16 %v131
  %v404 = vunpack.c.l.b16 %v132
  %v405 = vunpack.c.h.b16 %v132
  %v406 = vunpack.c.l.b16 %v133
  %v407 = vunpack.c.h.b16 %v133
  %v408 = vunpack.c.l.b16 %v134
  %v409 = vunpack.c.h.b16 %v134
  %v410 = vunpack.c.l.b16 %v135
  %v411 = vunpack.c.h.b16 %v135
  %v412 = vunpack.c.l.b16 %v136
  %v413 = vunpack.c.h.b16 %v136
  %v414 = vunpack.c.l.b16 %v137
  %v415 = vunpack.c.h.b16 %v137
  %v416 = vunpack.c.l.b16 %v138
  %v417 = vunpack.c.h.b16 %v138
  %v418 = vunpack.c.l.b16 %v139
  %v419 = vunpack.c.h.b16 %v139
  %v420 = vunpack.c.l.b16 %v140
  %v421 = vunpack.c.h.b16 %v140
  %v422 = vunpack.c.l.b16 %v141
  %v423 = vunpack.c.h.b16 %v141
  %v424 = vunpack.c.l.b16 %v142
  %v425 = vunpack.c.h.b16 %v142
  %v426 = vunpack.c.l.b16 %v143
  %v427 = vunpack.c.h.b16 %v143
  %v428 = vunpack.c.l.b16 %v144
  %v429 = vunpack.c.h.b16 %v144
  %v430 = vunpack.c.l.b16 %v145
  %v431 = vunpack.c.h.b16 %v145
  %v432 = vunpack.c.l.b16 %v146
  %v433 = vunpack.c.h.b16 %v146
  %v434 = vunpack.c.l.b16 %v147
  %v435 = vunpack.c.h.b16 %v147
  %v436 = vunpack.c.l.b16 %v148
  %v437 = vunpack.c.h.b16 %v148
  %v438 = vunpack.c.l.b16 %v149
  %v439 = vunpack.c.h.b16 %v149
  %v440 = vunpack.c.l.b16 %v150
  %v441 = vunpack.c.h.b16 %v150
  %v442 = vunpack.c.l.b16 %v151
  %v443 = vunpack.c.h.b16 %v151
  %v444 = vunpack.c.l.b16 %v152
  %v445 = vunpack.c.h.b16 %v152
  %v446 = vunpack.c.l.b16 %v153
  %v447 = vunpack.c.h.b16 %v153
  %v448 = vunpack.c.l.b16 %v154
  %v449 = vunpack.c.h.b16 %v154
  %v450 = vunpack.c.l.b16 %v155
  %v451 = vunpack.c.h.b16 %v155
  %v452 = vunpack.c.l.b16 %v156
  %v453 = vunpack.c.h.b16 %v156
  %v454 = vunpack.c.l.b16 %v157
  %v455 = vunpack.c.h.b16 %v157
  %v456 = vunpack.c.l.b16 %v158
  %v457 = vunpack.c.h.b16 %v158
  %v458 = vunpack.c.l.b16 %v159
  %v459 = vunpack.c.h.b16 %v159
  %v460 = vunpack.c.l.b16 %v160
  %v461 = vunpack.c.h.b16 %v160
  %v462 = vunpack.c.l.b16 %v161
  %v463 = vunpack.c.h.b16 %v161
  %v464 = vunpack.c.l.b16 %v162
  %v465 = vunpack.c.h.b16 %v162
  %v466 = vunpack.c.l.b16 %v163
  %v467 = vunpack.c.h.b16 %v163
  %v468 = vunpack.c.l.b16 %v164
  %v469 = vunpack.c.h.b16 %v164
  %v470 = vunpack.c.l.b16 %v165
  %v471 = vunpack.c.h.b16 %v165
  %v472 = vpack.c.b16 %v278, %v276
  %v473 = vpack.c.b16 %v279, %v277
  %v474 = vpack.c.b16 %v282, %v280
  %v475 = vpack.c.b16 %v283, %v281
  %v476 = vpack.c.b16 %v286, %v284
  %v477 = vpack.c.b16 %v287, %v285
  %v478 = vpack.c.b16 %v290, %v288
  %v479 = vpack.c.b16 %v291, %v289
  %v480 = vpack.c.b16 %v294, %v292
  %v481 = vpack.c.b16 %v295, %v293
  %v482 = vpack.c.b16 %v298, %v296
  %v483 = vpack.c.b16 %v299, %v297
  %v484 = vpack.c.b16 %v302, %v300
  %v485 = vpack.c.b16 %v303, %v301
  %v486 = vpack.c.b16 %v306, %v304
  %v487 = vpack.c.b16 %v307, %v305
  %v488 = vpack.c.b16 %v310, %v308
  %v489 = vpack.c.b16 %v311, %v309
  %v490 = vpack.c.b16 %v314, %v312
  %v491 = vpack.c.b16 %v315, %v313
  %v492 = vpack.c.b16 %v318, %v316
  %v493 = vpack.c.b16 %v319, %v317
  %v494 = vpack.c.b16 %v322, %v320
  %v495 = vpack.c.b16 %v323, %v321
  %v496 = vpack.c.b16 %v326, %v324
  %v497 = vpack.c.b16 %v327, %v325
  %v498 = vpack.c.b16 %v330, %v328
  %v499 = vpack.c.b16 %v331, %v329
  %v500 = vpack.c.b16 %v334, %v332
  %v501 = vpack.c.b16 %v335, %v333
  %v502 = vpack.c.b16 %v338, %v336
  %v503 = vpack.c.b16 %v339, %v337
  %v504 = vpack.c.b16 %v342, %v340
  %v505 = vpack.c.b16 %v343, %v341
  %v506 = vpack.c.b16 %v346, %v344
  %v507 = vpack.c.b16 %v347, %v345
  %v508 = vpack.c.b16 %v350, %v348
  %v509 = vpack.c.b16 %v351, %v349
  %v510 = vpack.c.b16 %v354, %v352
  %v511 = vpack.c.b16 %v355, %v353
  %v512 = vpack.c.b16 %v358, %v356
  %v513 = vpack.c.b16 %v359, %v357
  %v514 = vpack.c.b16 %v362, %v360
  %v515 = vpack.c.b16 %v363, %v361
  %v516 = vpack.c.b16 %v366, %v364
  %v517 = vpack.c.b16 %v367, %v365
  %v518 = vpack.c.b16 %v370, %v368
  %v519 = vpack.c.b16 %v371, %v369
  %v520 = vpack.c.b16 %v374, %v372
  %v521 = vpack.c.b16 %v375, %v373
  %v522 = vpack.c.b16 %v378, %v376
  %v523 = vpack.c.b16 %v379, %v377
  %v524 = vpack.c.b16 %v382, %v380
  %v525 = vpack.c.b16 %v383, %v381
  %v526 = vpack.c.b16 %v386, %v384
  %v527 = vpack.c.b16 %v387, %v385
  %v528 = vpack.c.b16 %v390, %v388
  %v529 = vpack.c.b16 %v391, %v389
  %v530 = vpack.c.b16 %v394, %v392
  %v531 = vpack.c.b16 %v395, %v393
  %v532 = vpack.c.b16 %v398, %v396
  %v533 = vpack.c.b16 %v399, %v397
  %v534 = vpack.c.b16 %v402, %v400
  %v535 = vpack.c.b16 %v403, %v401
  %v536 = vpack.c.b16 %v406, %v404
  %v537 = vpack.c.b16 %v407, %v405
  %v538 = vpack.c.b16 %v410, %v408
  %v539 = vpack.c.b16 %v411, %v409
  %v540 = vpack.c.b16 %v414, %v412
  %v541 = vpack.c.b16 %v415, %v413
  %v542 = vpack.c.b16 %v418, %v416
  %v543 = vpack.c.b16 %v419, %v417
  %v544 = vpack.c.b16 %v422, %v420
  %v545 = vpack.c.b16 %v423, %v421
  %v546 = vpack.c.b16 %v426, %v424
  %v547 = vpack.c.b16 %v427, %v425
  %v548 = vpack.c.b16 %v430, %v428
  %v549 = vpack.c.b16 %v431, %v429
  %v550 = vpack.c.b16 %v434, %v432
  %v551 = vpack.c.b16 %v435, %v433
  %v552 = vpack.c.b16 %v438, %v436
  %v553 = vpack.c.b16 %v439, %v437
  %v554 = vpack.c.b16 %v442, %v440
  %v555 = vpack.c.b16 %v443, %v441
  %v556 = vpack.c.b16 %v446, %v444
  %v557 = vpack.c.b16 %v447, %v445
  %v558 = vpack.c.b16 %v450, %v448
  %v559 = vpack.c.b16 %v451, %v449
  %v560 = vpack.c.b16 %v454, %v452
  %v561 = vpack.c.b16 %v455, %v453
  %v562 = vpack.c.b16 %v458, %v456
  %v563 = vpack.c.b16 %v459, %v457
  %v564 = vpack.c.b16 %v462, %v460
  %v565 = vpack.c.b16 %v463, %v461
  %v566 = vpack.c.b16 %v466, %v464
  %v567 = vpack.c.b16 %v467, %v465
  %v568 = vpack.c.b16 %v470, %v468
  %v569 = vpack.c.b16 %v471, %v469
  %vm668 = vcmask 130048
  %v670 = vsel %vm668, %v67, 0
  %672 = vmatprep.subr.bf16.mxu0 %v473
  %673 = vmatpush1.bf16.msra.mxu0 %v472
  %674 = vmatprep.subr.bf16.mxu0 %v475
  %675 = vmatpush1.bf16.msra.mxu0 %v474
  %676 = vmatprep.subr.bf16.mxu0 %v477
  %677 = vmatpush1.bf16.msra.mxu0 %v476
  %678 = vmatprep.subr.bf16.mxu0 %v479
  %679 = vmatpush1.bf16.msra.mxu0 %v478
  %680 = vmatprep.subr.bf16.mxu0 %v481
  %681 = vmatpush1.bf16.msra.mxu0 %v480
  %682 = vmatprep.subr.bf16.mxu0 %v483
  %683 = vmatpush1.bf16.msra.mxu0 %v482
  %684 = vmatprep.subr.bf16.mxu0 %v485
  %685 = vmatpush1.bf16.msra.mxu0 %v484
  %686 = vmatprep.subr.bf16.mxu0 %v487
  %687 = vmatpush1.bf16.msra.mxu0 %v486
  %688 = vmatprep.subr.bf16.mxu0 %v489
  %689 = vmatpush1.bf16.msra.mxu0 %v488
  %690 = vmatprep.subr.bf16.mxu0 %v491
  %691 = vmatpush1.bf16.msra.mxu0 %v490
  %692 = vmatprep.subr.bf16.mxu0 %v493
  %693 = vmatpush1.bf16.msra.mxu0 %v492
  %694 = vmatprep.subr.bf16.mxu0 %v495
  %695 = vmatpush1.bf16.msra.mxu0 %v494
  %696 = vmatprep.subr.bf16.mxu0 %v497
  %697 = vmatpush1.bf16.msra.mxu0 %v496
  %698 = vmatprep.subr.bf16.mxu0 %v499
  %699 = vmatpush1.bf16.msra.mxu0 %v498
  %700 = vmatprep.subr.bf16.mxu0 %v501
  %701 = vmatpush1.bf16.msra.mxu0 %v500
  %702 = vmatprep.subr.bf16.mxu0 %v503
  %703 = vmatpush1.bf16.msra.mxu0 %v502
  %704 = vmatprep.mubr.bf16.mxu0 %v62
  %705 = vmatmul.mubr.bf16.gmra.mrb[0].mxu0 %v61
  %v706 = vpop.f32.mrb[0].mxu0
  %v707 = vadd.f32 %v171, %v706
  %v708 = vpop.f32.mrb[0].mxu0
  %v709 = vadd.f32 %v175, %v708
  %v710 = vpop.f32.mrb[0].mxu0
  %v711 = vadd.f32 %v171, %v710
  %v712 = vpop.f32.mrb[0].mxu0
  %v713 = vadd.f32 %v175, %v712
  %714 = vdwg.mxu0
  %715 = vmatprep.subr.bf16.mxu0 %v505
  %716 = vmatpush1.bf16.msra.mxu0 %v504
  %717 = vmatprep.subr.bf16.mxu0 %v507
  %718 = vmatpush1.bf16.msra.mxu0 %v506
  %719 = vmatprep.subr.bf16.mxu0 %v509
  %720 = vmatpush1.bf16.msra.mxu0 %v508
  %721 = vmatprep.subr.bf16.mxu0 %v511
  %722 = vmatpush1.bf16.msra.mxu0 %v510
  %723 = vmatprep.subr.bf16.mxu0 %v513
  %724 = vmatpush1.bf16.msra.mxu0 %v512
  %725 = vmatprep.subr.bf16.mxu0 %v515
  %726 = vmatpush1.bf16.msra.mxu0 %v514
  %727 = vmatprep.subr.bf16.mxu0 %v517
  %728 = vmatpush1.bf16.msra.mxu0 %v516
  %729 = vmatprep.subr.bf16.mxu0 %v519
  %730 = vmatpush1.bf16.msra.mxu0 %v518
  %731 = vmatprep.subr.bf16.mxu0 %v521
  %732 = vmatpush1.bf16.msra.mxu0 %v520
  %733 = vmatprep.subr.bf16.mxu0 %v523
  %734 = vmatpush1.bf16.msra.mxu0 %v522
  %735 = vmatprep.subr.bf16.mxu0 %v525
  %736 = vmatpush1.bf16.msra.mxu0 %v524
  %737 = vmatprep.subr.bf16.mxu0 %v527
  %738 = vmatpush1.bf16.msra.mxu0 %v526
  %739 = vmatprep.subr.bf16.mxu0 %v529
  %740 = vmatpush1.bf16.msra.mxu0 %v528
  %741 = vmatprep.subr.bf16.mxu0 %v531
  %742 = vmatpush1.bf16.msra.mxu0 %v530
  %743 = vmatprep.subr.bf16.mxu0 %v533
  %744 = vmatpush1.bf16.msra.mxu0 %v532
  %745 = vmatprep.subr.bf16.mxu0 %v535
  %746 = vmatpush1.bf16.msra.mxu0 %v534
  %747 = vmatprep.mubr.bf16.mxu0 %v64
  %748 = vmatmul.mubr.bf16.gmra.mrb[0].mxu0 %v63
  %v749 = vpop.f32.mrb[0].mxu0
  %v750 = vadd.f32 %v707, %v749
  %v751 = vpop.f32.mrb[0].mxu0
  %v752 = vadd.f32 %v709, %v751
  %v753 = vpop.f32.mrb[0].mxu0
  %v754 = vadd.f32 %v711, %v753
  %v755 = vpop.f32.mrb[0].mxu0
  %v756 = vadd.f32 %v713, %v755
  %757 = vdwg.mxu0
  %758 = vmatprep.subr.bf16.mxu0 %v537
  %759 = vmatpush1.bf16.msra.mxu0 %v536
  %760 = vmatprep.subr.bf16.mxu0 %v539
  %761 = vmatpush1.bf16.msra.mxu0 %v538
  %762 = vmatprep.subr.bf16.mxu0 %v541
  %763 = vmatpush1.bf16.msra.mxu0 %v540
  %764 = vmatprep.subr.bf16.mxu0 %v543
  %765 = vmatpush1.bf16.msra.mxu0 %v542
  %766 = vmatprep.subr.bf16.mxu0 %v545
  %767 = vmatpush1.bf16.msra.mxu0 %v544
  %768 = vmatprep.subr.bf16.mxu0 %v547
  %769 = vmatpush1.bf16.msra.mxu0 %v546
  %770 = vmatprep.subr.bf16.mxu0 %v549
  %771 = vmatpush1.bf16.msra.mxu0 %v548
  %772 = vmatprep.subr.bf16.mxu0 %v551
  %773 = vmatpush1.bf16.msra.mxu0 %v550
  %774 = vmatprep.subr.bf16.mxu0 %v553
  %775 = vmatpush1.bf16.msra.mxu0 %v552
  %776 = vmatprep.subr.bf16.mxu0 %v555
  %777 = vmatpush1.bf16.msra.mxu0 %v554
  %778 = vmatprep.subr.bf16.mxu0 %v557
  %779 = vmatpush1.bf16.msra.mxu0 %v556
  %780 = vmatprep.subr.bf16.mxu0 %v559
  %781 = vmatpush1.bf16.msra.mxu0 %v558
  %782 = vmatprep.subr.bf16.mxu0 %v561
  %783 = vmatpush1.bf16.msra.mxu0 %v560
  %784 = vmatprep.subr.bf16.mxu0 %v563
  %785 = vmatpush1.bf16.msra.mxu0 %v562
  %786 = vmatprep.subr.bf16.mxu0 %v565
  %787 = vmatpush1.bf16.msra.mxu0 %v564
  %788 = vmatprep.subr.bf16.mxu0 %v567
  %789 = vmatpush1.bf16.msra.mxu0 %v566
  %790 = vmatprep.mubr.bf16.mxu0 %v66
  %791 = vmatmul.mubr.bf16.gmra.mrb[0].mxu0 %v65
  %v792 = vpop.f32.mrb[0].mxu0
  %v793 = vadd.f32 %v750, %v792
  %v794 = vpop.f32.mrb[0].mxu0
  %v795 = vadd.f32 %v752, %v794
  %v796 = vpop.f32.mrb[0].mxu0
  %v797 = vadd.f32 %v754, %v796
  %v798 = vpop.f32.mrb[0].mxu0
  %v799 = vadd.f32 %v756, %v798
  %800 = vdwg.mxu0
  %801 = vmatprep.subr.bf16.mxu0 %v569
  %802 = vmatpush1.bf16.msra.mxu0 %v568
  %803 = vmatprep.subr.bf16.mxu0 0
  %804 = vmatpush1.bf16.msra.mxu0 0
  %805 = vmatprep.subr.bf16.mxu0 0
  %806 = vmatpush1.bf16.msra.mxu0 0
  %807 = vmatprep.subr.bf16.mxu0 0
  %808 = vmatpush1.bf16.msra.mxu0 0
  %809 = vmatprep.subr.bf16.mxu0 0
  %810 = vmatpush1.bf16.msra.mxu0 0
  %811 = vmatprep.subr.bf16.mxu0 0
  %812 = vmatpush1.bf16.msra.mxu0 0
  %813 = vmatprep.subr.bf16.mxu0 0
  %814 = vmatpush1.bf16.msra.mxu0 0
  %815 = vmatprep.subr.bf16.mxu0 0
  %816 = vmatpush1.bf16.msra.mxu0 0
  %817 = vmatprep.subr.bf16.mxu0 0
  %818 = vmatpush1.bf16.msra.mxu0 0
  %819 = vmatprep.subr.bf16.mxu0 0
  %820 = vmatpush1.bf16.msra.mxu0 0
  %821 = vmatprep.subr.bf16.mxu0 0
  %822 = vmatpush1.bf16.msra.mxu0 0
  %823 = vmatprep.subr.bf16.mxu0 0
  %824 = vmatpush1.bf16.msra.mxu0 0
  %825 = vmatprep.subr.bf16.mxu0 0
  %826 = vmatpush1.bf16.msra.mxu0 0
  %827 = vmatprep.subr.bf16.mxu0 0
  %828 = vmatpush1.bf16.msra.mxu0 0
  %829 = vmatprep.subr.bf16.mxu0 0
  %830 = vmatpush1.bf16.msra.mxu0 0
  %831 = vmatprep.subr.bf16.mxu0 0
  %832 = vmatpush1.bf16.msra.mxu0 0
  %833 = vmatprep.mubr.bf16.mxu0 0
  %834 = vmatmul.mubr.bf16.gmra.mrb[0].mxu0 %v670
  %v835 = vpop.f32.mrb[0].mxu0
  %v836 = vadd.f32 %v793, %v835
  %v837 = vpop.f32.mrb[0].mxu0
  %v838 = vadd.f32 %v795, %v837
  %v839 = vpop.f32.mrb[0].mxu0
  %v840 = vadd.f32 %v797, %v839
  %v841 = vpop.f32.mrb[0].mxu0
  %v842 = vadd.f32 %v799, %v841
  %843 = vdwg.mxu0
  %v844 = vmax.f32 %v836, 0.0
  %v845 = vmax.f32 %v838, 0.0
  %v846 = vmax.f32 %v840, 0.0
  %v847 = vmax.f32 %v842, 0.0
  %v848 = vpack.c.bf16 %v846, %v844
  %v849 = vpack.c.bf16 %v847, %v845
  %v850 = vld [vmem:[%s3] sm:$0xf]
  %v851 = vld [vmem:[%s3 + $0x4] sm:$0xf]
  %v852 = vld [vmem:[%s3 + $0x8] sm:$0xf]
  %v853 = vld [vmem:[%s3 + $0xc] sm:$0xf]
  %v854 = vld [vmem:[%s3 + $0x10] sm:$0xf]
  %v855 = vld [vmem:[%s3 + $0x14] sm:$0xf]
  %v856 = vld [vmem:[%s3 + $0x18] sm:$0xf]
  %v857 = vld [vmem:[%s3 + $0x1c] sm:$0xf]
  %v858 = vld [vmem:[%s3 + $0x20] sm:$0xf]
  %v859 = vld [vmem:[%s3 + $0x24] sm:$0xf]
  %v860 = vld [vmem:[%s3 + $0x28] sm:$0xf]
  %v861 = vld [vmem:[%s3 + $0x2c] sm:$0xf]
  %v862 = vld [vmem:[%s3 + $0x30] sm:$0xf]
  %v863 = vld [vmem:[%s3 + $0x34] sm:$0xf]
  %v864 = vld [vmem:[%s3 + $0x38] sm:$0xf]
  %v865 = vld [vmem:[%s3 + $0x3c] sm:$0xf]
  %v866 = vld [vmem:[%s3 + $0x40] sm:$0xf]
  %v867 = vld [vmem:[%s3 + $0x44] sm:$0xf]
  %v868 = vld [vmem:[%s3 + $0x48] sm:$0xf]
  %v869 = vld [vmem:[%s3 + $0x4c] sm:$0xf]
  %v870 = vld [vmem:[%s3 + $0x50] sm:$0xf]
  %v871 = vld [vmem:[%s3 + $0x54] sm:$0xf]
  %v872 = vld [vmem:[%s3 + $0x58] sm:$0xf]
  %v873 = vld [vmem:[%s3 + $0x5c] sm:$0xf]
  %v874 = vld [vmem:[%s3 + $0x60] sm:$0xf]
  %v875 = vld [vmem:[%s3 + $0x64] sm:$0xf]
  %v876 = vld [vmem:[%s3 + $0x68] sm:$0xf]
  %v877 = vld [vmem:[%s3 + $0x6c] sm:$0xf]
  %v878 = vld [vmem:[%s3 + $0x70] sm:$0xf]
  %v879 = vld [vmem:[%s3 + $0x74] sm:$0xf]
  %v880 = vld [vmem:[%s3 + $0x78] sm:$0xf]
  %v881 = vld [vmem:[%s3 + $0x7c] sm:$0xf]
  %v882 = vld [vmem:[%s4] sm:$0x1]
  %v884 = vlaneseq
  %v885 = vshrl.u32 %v884, 7
  %v886 = vsub.s32 0, %v885
  %v887 = vrot.slane %v882, %v886
  %v921 = vunpack.c.l.b16 %v850
  %v922 = vunpack.c.l.b16 %v851
  %v923 = vunpack.c.l.b16 %v852
  %v924 = vunpack.c.l.b16 %v853
  %v925 = vunpack.c.l.b16 %v854
  %v926 = vunpack.c.l.b16 %v855
  %v927 = vunpack.c.l.b16 %v856
  %v928 = vunpack.c.l.b16 %v857
  %v929 = vunpack.c.l.b16 %v858
  %v930 = vunpack.c.l.b16 %v859
  %v931 = vunpack.c.l.b16 %v860
  %v932 = vunpack.c.l.b16 %v861
  %v933 = vunpack.c.l.b16 %v862
  %v934 = vunpack.c.l.b16 %v863
  %v935 = vunpack.c.l.b16 %v864
  %v936 = vunpack.c.l.b16 %v865
  %v937 = vunpack.c.l.b16 %v866
  %v938 = vunpack.c.l.b16 %v867
  %v939 = vunpack.c.l.b16 %v868
  %v940 = vunpack.c.l.b16 %v869
  %v941 = vunpack.c.l.b16 %v870
  %v942 = vunpack.c.l.b16 %v871
  %v943 = vunpack.c.l.b16 %v872
  %v944 = vunpack.c.l.b16 %v873
  %v945 = vunpack.c.l.b16 %v874
  %v946 = vunpack.c.l.b16 %v875
  %v947 = vunpack.c.l.b16 %v876
  %v948 = vunpack.c.l.b16 %v877
  %v949 = vunpack.c.l.b16 %v878
  %v950 = vunpack.c.l.b16 %v879
  %v951 = vunpack.c.l.b16 %v880
  %v952 = vunpack.c.l.b16 %v881
  %v953 = vpack.c.b16 %v922, %v921
  %v954 = vpack.c.b16 %v924, %v923
  %v955 = vpack.c.b16 %v926, %v925
  %v956 = vpack.c.b16 %v928, %v927
  %v957 = vpack.c.b16 %v930, %v929
  %v958 = vpack.c.b16 %v932, %v931
  %v959 = vpack.c.b16 %v934, %v933
  %v960 = vpack.c.b16 %v936, %v935
  %v961 = vpack.c.b16 %v938, %v937
  %v962 = vpack.c.b16 %v940, %v939
  %v963 = vpack.c.b16 %v942, %v941
  %v964 = vpack.c.b16 %v944, %v943
  %v965 = vpack.c.b16 %v946, %v945
  %v966 = vpack.c.b16 %v948, %v947
  %v967 = vpack.c.b16 %v950, %v949
  %v968 = vpack.c.b16 %v952, %v951
  %985 = vmatprep.subr.bf16.mxu0 0
  %986 = vmatpush1.bf16.msra.mxu0 %v953
  %987 = vmatprep.subr.bf16.mxu0 0
  %988 = vmatpush1.bf16.msra.mxu0 %v954
  %989 = vmatprep.subr.bf16.mxu0 0
  %990 = vmatpush1.bf16.msra.mxu0 %v955
  %991 = vmatprep.subr.bf16.mxu0 0
  %992 = vmatpush1.bf16.msra.mxu0 %v956
  %993 = vmatprep.subr.bf16.mxu0 0
  %994 = vmatpush1.bf16.msra.mxu0 %v957
  %995 = vmatprep.subr.bf16.mxu0 0
  %996 = vmatpush1.bf16.msra.mxu0 %v958
  %997 = vmatprep.subr.bf16.mxu0 0
  %998 = vmatpush1.bf16.msra.mxu0 %v959
  %999 = vmatprep.subr.bf16.mxu0 0
  %1000 = vmatpush1.bf16.msra.mxu0 %v960
  %1001 = vmatprep.subr.bf16.mxu0 0
  %1002 = vmatpush1.bf16.msra.mxu0 %v961
  %1003 = vmatprep.subr.bf16.mxu0 0
  %1004 = vmatpush1.bf16.msra.mxu0 %v962
  %1005 = vmatprep.subr.bf16.mxu0 0
  %1006 = vmatpush1.bf16.msra.mxu0 %v963
  %1007 = vmatprep.subr.bf16.mxu0 0
  %1008 = vmatpush1.bf16.msra.mxu0 %v964
  %1009 = vmatprep.subr.bf16.mxu0 0
  %1010 = vmatpush1.bf16.msra.mxu0 %v965
  %1011 = vmatprep.subr.bf16.mxu0 0
  %1012 = vmatpush1.bf16.msra.mxu0 %v966
  %1013 = vmatprep.subr.bf16.mxu0 0
  %1014 = vmatpush1.bf16.msra.mxu0 %v967
  %1015 = vmatprep.subr.bf16.mxu0 0
  %1016 = vmatpush1.bf16.msra.mxu0 %v968
  %1017 = vmatprep.mubr.bf16.mxu0 %v849
  %1018 = vmatmul.mubr.bf16.gmra.mrb[0].mxu0 %v848
  %v1019 = vpop.f32.mrb[0].mxu0
  %v1020 = vadd.f32 %v887, %v1019
  %v1021 = vpop.f32.mrb[0].mxu0
  %v1022 = vpop.f32.mrb[0].mxu0
  %v1023 = vadd.f32 %v887, %v1022
  %v1024 = vpop.f32.mrb[0].mxu0
  %1025 = vdwg.mxu0
  %v1026 = vmax.f32 %v1020, 0.0
  %v1027 = vmax.f32 %v1023, 0.0
  %v1028 = vpack.c.bf16 %v1027, %v1026
  %v1029 = vld [vmem:[%s5] sm:$0xf]
  %v1030 = vld [vmem:[%s5 + $0x4] sm:$0xf]
  %v1031 = vld [vmem:[%s5 + $0x8] sm:$0xf]
  %v1032 = vld [vmem:[%s5 + $0xc] sm:$0xf]
  %v1033 = vld [vmem:[%s5 + $0x10] sm:$0xf]
  %v1034 = vld [vmem:[%s5 + $0x14] sm:$0xf]
  %v1035 = vld [vmem:[%s5 + $0x18] sm:$0xf]
  %v1036 = vld [vmem:[%s5 + $0x1c] sm:$0xf]
  %v1037 = vld [vmem:[%s6] sm:$0x1]
  %v1039 = vlaneseq
  %v1040 = vshrl.u32 %v1039, 7
  %v1041 = vsub.s32 0, %v1040
  %v1042 = vrot.slane %v1037, %v1041
  %v1052 = vunpack.c.l.b16 %v1029
  %v1053 = vunpack.c.l.b16 %v1030
  %v1054 = vunpack.c.l.b16 %v1031
  %v1055 = vunpack.c.l.b16 %v1032
  %v1056 = vunpack.c.l.b16 %v1033
  %v1057 = vunpack.c.l.b16 %v1034
  %v1058 = vunpack.c.l.b16 %v1035
  %v1059 = vunpack.c.l.b16 %v1036
  %v1060 = vpack.c.b16 %v1053, %v1052
  %v1061 = vpack.c.b16 %v1055, %v1054
  %v1062 = vpack.c.b16 %v1057, %v1056
  %v1063 = vpack.c.b16 %v1059, %v1058
  %vm1068 = vcmask 523264
  %v1070 = vsel %vm1068, %v1028, 0
  %1072 = vmatprep.subr.bf16.mxu0 0
  %1073 = vmatpush1.bf16.msra.mxu0 %v1060
  %1074 = vmatprep.subr.bf16.mxu0 0
  %1075 = vmatpush1.bf16.msra.mxu0 %v1061
  %1076 = vmatprep.subr.bf16.mxu0 0
  %1077 = vmatpush1.bf16.msra.mxu0 %v1062
  %1078 = vmatprep.subr.bf16.mxu0 0
  %1079 = vmatpush1.bf16.msra.mxu0 %v1063
  %1080 = vmatprep.subr.bf16.mxu0 0
  %1081 = vmatpush1.bf16.msra.mxu0 0
  %1082 = vmatprep.subr.bf16.mxu0 0
  %1083 = vmatpush1.bf16.msra.mxu0 0
  %1084 = vmatprep.subr.bf16.mxu0 0
  %1085 = vmatpush1.bf16.msra.mxu0 0
  %1086 = vmatprep.subr.bf16.mxu0 0
  %1087 = vmatpush1.bf16.msra.mxu0 0
  %1088 = vmatprep.subr.bf16.mxu0 0
  %1089 = vmatpush1.bf16.msra.mxu0 0
  %1090 = vmatprep.subr.bf16.mxu0 0
  %1091 = vmatpush1.bf16.msra.mxu0 0
  %1092 = vmatprep.subr.bf16.mxu0 0
  %1093 = vmatpush1.bf16.msra.mxu0 0
  %1094 = vmatprep.subr.bf16.mxu0 0
  %1095 = vmatpush1.bf16.msra.mxu0 0
  %1096 = vmatprep.subr.bf16.mxu0 0
  %1097 = vmatpush1.bf16.msra.mxu0 0
  %1098 = vmatprep.subr.bf16.mxu0 0
  %1099 = vmatpush1.bf16.msra.mxu0 0
  %1100 = vmatprep.subr.bf16.mxu0 0
  %1101 = vmatpush1.bf16.msra.mxu0 0
  %1102 = vmatprep.subr.bf16.mxu0 0
  %1103 = vmatpush1.bf16.msra.mxu0 0
  %1104 = vmatprep.mubr.bf16.mxu0 0
  %1105 = vmatmul.mubr.bf16.gmra.mrb[0].mxu0 %v1070
  %v1106 = vpop.f32.mrb[0].mxu0
  %v1107 = vadd.f32 %v1042, %v1106
  %v1108 = vpop.f32.mrb[0].mxu0
  %v1109 = vpop.f32.mrb[0].mxu0
  %v1110 = vadd.f32 %v1042, %v1109
  %v1111 = vpop.f32.mrb[0].mxu0
  %1112 = vdwg.mxu0
  %v1113 = vmax.f32 %v1107, 0.0
  %v1114 = vmax.f32 %v1110, 0.0
  %1115 = vst [vmem:[%s14] sm:$0xff] %v1113
  %1116 = vst [vmem:[%s14 + $0x8] sm:$0xff] %v1114
  %v1117 = vpack.c.bf16 %v1114, %v1113
  %v1118 = vld [vmem:[%s7] sm:$0xf]
  %v1119 = vld [vmem:[%s7 + $0x4] sm:$0xf]
  %v1120 = vld [vmem:[%s7 + $0x8] sm:$0xf]
  %v1121 = vld [vmem:[%s7 + $0xc] sm:$0xf]
  %v1122 = vld [vmem:[%s7 + $0x10] sm:$0xf]
  %v1123 = vld [vmem:[%s7 + $0x14] sm:$0xf]
  %v1124 = vld [vmem:[%s7 + $0x18] sm:$0xf]
  %v1125 = vld [vmem:[%s7 + $0x1c] sm:$0xf]
  %v1126 = vld [vmem:[%s7 + $0x20] sm:$0xf]
  %v1127 = vld [vmem:[%s7 + $0x24] sm:$0xf]
  %v1128 = vld [vmem:[%s7 + $0x28] sm:$0xf]
  %v1129 = vld [vmem:[%s7 + $0x2c] sm:$0xf]
  %v1130 = vld [vmem:[%s7 + $0x30] sm:$0xf]
  %v1131 = vld [vmem:[%s7 + $0x34] sm:$0xf]
  %v1132 = vld [vmem:[%s7 + $0x38] sm:$0xf]
  %v1133 = vld [vmem:[%s7 + $0x3c] sm:$0xf]
  %v1134 = vld [vmem:[%s8] sm:$0x1]
  %v1136 = vlaneseq
  %v1137 = vshrl.u32 %v1136, 7
  %v1138 = vsub.s32 0, %v1137
  %v1139 = vrot.slane %v1134, %v1138
  %v1157 = vunpack.c.l.b16 %v1118
  %v1158 = vunpack.c.l.b16 %v1119
  %v1159 = vunpack.c.l.b16 %v1120
  %v1160 = vunpack.c.l.b16 %v1121
  %v1161 = vunpack.c.l.b16 %v1122
  %v1162 = vunpack.c.l.b16 %v1123
  %v1163 = vunpack.c.l.b16 %v1124
  %v1164 = vunpack.c.l.b16 %v1125
  %v1165 = vunpack.c.l.b16 %v1126
  %v1166 = vunpack.c.l.b16 %v1127
  %v1167 = vunpack.c.l.b16 %v1128
  %v1168 = vunpack.c.l.b16 %v1129
  %v1169 = vunpack.c.l.b16 %v1130
  %v1170 = vunpack.c.l.b16 %v1131
  %v1171 = vunpack.c.l.b16 %v1132
  %v1172 = vunpack.c.l.b16 %v1133
  %v1173 = vpack.c.b16 %v1158, %v1157
  %v1174 = vpack.c.b16 %v1160, %v1159
  %v1175 = vpack.c.b16 %v1162, %v1161
  %v1176 = vpack.c.b16 %v1164, %v1163
  %v1177 = vpack.c.b16 %v1166, %v1165
  %v1178 = vpack.c.b16 %v1168, %v1167
  %v1179 = vpack.c.b16 %v1170, %v1169
  %v1180 = vpack.c.b16 %v1172, %v1171
  %1189 = vmatprep.subr.bf16.mxu0 0
  %1190 = vmatpush1.bf16.msra.mxu0 %v1173
  %1191 = vmatprep.subr.bf16.mxu0 0
  %1192 = vmatpush1.bf16.msra.mxu0 %v1174
  %1193 = vmatprep.subr.bf16.mxu0 0
  %1194 = vmatpush1.bf16.msra.mxu0 %v1175
  %1195 = vmatprep.subr.bf16.mxu0 0
  %1196 = vmatpush1.bf16.msra.mxu0 %v1176
  %1197 = vmatprep.subr.bf16.mxu0 0
  %1198 = vmatpush1.bf16.msra.mxu0 %v1177
  %1199 = vmatprep.subr.bf16.mxu0 0
  %1200 = vmatpush1.bf16.msra.mxu0 %v1178
  %1201 = vmatprep.subr.bf16.mxu0 0
  %1202 = vmatpush1.bf16.msra.mxu0 %v1179
  %1203 = vmatprep.subr.bf16.mxu0 0
  %1204 = vmatpush1.bf16.msra.mxu0 %v1180
  %1205 = vmatprep.subr.bf16.mxu0 0
  %1206 = vmatpush1.bf16.msra.mxu0 0
  %1207 = vmatprep.subr.bf16.mxu0 0
  %1208 = vmatpush1.bf16.msra.mxu0 0
  %1209 = vmatprep.subr.bf16.mxu0 0
  %1210 = vmatpush1.bf16.msra.mxu0 0
  %1211 = vmatprep.subr.bf16.mxu0 0
  %1212 = vmatpush1.bf16.msra.mxu0 0
  %1213 = vmatprep.subr.bf16.mxu0 0
  %1214 = vmatpush1.bf16.msra.mxu0 0
  %1215 = vmatprep.subr.bf16.mxu0 0
  %1216 = vmatpush1.bf16.msra.mxu0 0
  %1217 = vmatprep.subr.bf16.mxu0 0
  %1218 = vmatpush1.bf16.msra.mxu0 0
  %1219 = vmatprep.subr.bf16.mxu0 0
  %1220 = vmatpush1.bf16.msra.mxu0 0
  %1221 = vmatprep.mubr.bf16.mxu0 0
  %1222 = vmatmul.mubr.bf16.gmra.mrb[0].mxu0 %v1117
  %v1223 = vpop.f32.mrb[0].mxu0
  %v1224 = vadd.f32 %v1139, %v1223
  %v1225 = vpop.f32.mrb[0].mxu0
  %v1226 = vpop.f32.mrb[0].mxu0
  %v1227 = vadd.f32 %v1139, %v1226
  %v1228 = vpop.f32.mrb[0].mxu0
  %1229 = vdwg.mxu0
  %v1230 = vmax.f32 %v1224, 0.0
  %v1231 = vmax.f32 %v1227, 0.0
  %v1232 = vpack.c.bf16 %v1231, %v1230
  %v1233 = vld [vmem:[%s9] sm:$0xff]
  %v1234 = vld [vmem:[%s9 + $0x8] sm:$0xff]
  %v1235 = vld [vmem:[%s9 + $0x10] sm:$0xff]
  %v1236 = vld [vmem:[%s9 + $0x18] sm:$0xff]
  %v1237 = vld [vmem:[%s9 + $0x20] sm:$0xff]
  %v1238 = vld [vmem:[%s9 + $0x28] sm:$0xff]
  %v1239 = vld [vmem:[%s9 + $0x30] sm:$0xff]
  %v1240 = vld [vmem:[%s9 + $0x38] sm:$0xff]
  %v1241 = vld [vmem:[%s10] sm:$0x3]
  %v1243 = vlaneseq
  %v1244 = vshrl.u32 %v1243, 7
  %v1245 = vsub.s32 0, %v1244
  %v1246 = vrot.slane %v1241, %v1245
  %v1247 = vlaneseq
  %v1248 = vshrl.u32 %v1247, 7
  %v1249 = vsub.s32 1, %v1248
  %v1250 = vrot.slane %v1241, %v1249
  %v1261 = vunpack.c.l.b16 %v1233
  %v1262 = vunpack.c.h.b16 %v1233
  %v1263 = vunpack.c.l.b16 %v1234
  %v1264 = vunpack.c.h.b16 %v1234
  %v1265 = vunpack.c.l.b16 %v1235
  %v1266 = vunpack.c.h.b16 %v1235
  %v1267 = vunpack.c.l.b16 %v1236
  %v1268 = vunpack.c.h.b16 %v1236
  %v1269 = vunpack.c.l.b16 %v1237
  %v1270 = vunpack.c.h.b16 %v1237
  %v1271 = vunpack.c.l.b16 %v1238
  %v1272 = vunpack.c.h.b16 %v1238
  %v1273 = vunpack.c.l.b16 %v1239
  %v1274 = vunpack.c.h.b16 %v1239
  %v1275 = vunpack.c.l.b16 %v1240
  %v1276 = vunpack.c.h.b16 %v1240
  %v1277 = vpack.c.b16 %v1263, %v1261
  %v1278 = vpack.c.b16 %v1264, %v1262
  %v1279 = vpack.c.b16 %v1267, %v1265
  %v1280 = vpack.c.b16 %v1268, %v1266
  %v1281 = vpack.c.b16 %v1271, %v1269
  %v1282 = vpack.c.b16 %v1272, %v1270
  %v1283 = vpack.c.b16 %v1275, %v1273
  %v1284 = vpack.c.b16 %v1276, %v1274
  %v1294 = vsel %vm1068, %v1232, 0
  %1296 = vmatprep.subr.bf16.mxu0 %v1278
  %1297 = vmatpush1.bf16.msra.mxu0 %v1277
  %1298 = vmatprep.subr.bf16.mxu0 %v1280
  %1299 = vmatpush1.bf16.msra.mxu0 %v1279
  %1300 = vmatprep.subr.bf16.mxu0 %v1282
  %1301 = vmatpush1.bf16.msra.mxu0 %v1281
  %1302 = vmatprep.subr.bf16.mxu0 %v1284
  %1303 = vmatpush1.bf16.msra.mxu0 %v1283
  %1304 = vmatprep.subr.bf16.mxu0 0
  %1305 = vmatpush1.bf16.msra.mxu0 0
  %1306 = vmatprep.subr.bf16.mxu0 0
  %1307 = vmatpush1.bf16.msra.mxu0 0
  %1308 = vmatprep.subr.bf16.mxu0 0
  %1309 = vmatpush1.bf16.msra.mxu0 0
  %1310 = vmatprep.subr.bf16.mxu0 0
  %1311 = vmatpush1.bf16.msra.mxu0 0
  %1312 = vmatprep.subr.bf16.mxu0 0
  %1313 = vmatpush1.bf16.msra.mxu0 0
  %1314 = vmatprep.subr.bf16.mxu0 0
  %1315 = vmatpush1.bf16.msra.mxu0 0
  %1316 = vmatprep.subr.bf16.mxu0 0
  %1317 = vmatpush1.bf16.msra.mxu0 0
  %1318 = vmatprep.subr.bf16.mxu0 0
  %1319 = vmatpush1.bf16.msra.mxu0 0
  %1320 = vmatprep.subr.bf16.mxu0 0
  %1321 = vmatpush1.bf16.msra.mxu0 0
  %1322 = vmatprep.subr.bf16.mxu0 0
  %1323 = vmatpush1.bf16.msra.mxu0 0
  %1324 = vmatprep.subr.bf16.mxu0 0
  %1325 = vmatpush1.bf16.msra.mxu0 0
  %1326 = vmatprep.subr.bf16.mxu0 0
  %1327 = vmatpush1.bf16.msra.mxu0 0
  %1328 = vmatprep.mubr.bf16.mxu0 0
  %1329 = vmatmul.mubr.bf16.gmra.mrb[0].mxu0 %v1294
  %v1330 = vpop.f32.mrb[0].mxu0
  %v1331 = vadd.f32 %v1246, %v1330
  %v1332 = vpop.f32.mrb[0].mxu0
  %v1333 = vadd.f32 %v1250, %v1332
  %v1334 = vpop.f32.mrb[0].mxu0
  %v1335 = vadd.f32 %v1246, %v1334
  %v1336 = vpop.f32.mrb[0].mxu0
  %v1337 = vadd.f32 %v1250, %v1336
  %1338 = vdwg.mxu0
  %v1339 = vmax.f32 %v1331, 0.0
  %v1340 = vmax.f32 %v1333, 0.0
  %v1341 = vmax.f32 %v1335, 0.0
  %v1342 = vmax.f32 %v1337, 0.0
  %v1343 = vpack.c.bf16 %v1341, %v1339
  %v1344 = vpack.c.bf16 %v1342, %v1340
  %v1345 = vld [vmem:[%s11] sm:$0xff]
  %v1346 = vld [vmem:[%s11 + $0x8] sm:$0xff]
  %v1347 = vld [vmem:[%s11 + $0x10] sm:$0xff]
  %v1348 = vld [vmem:[%s11 + $0x18] sm:$0xf]
  %v1349 = vld [vmem:[%s11 + $0x1c] sm:$0xff]
  %v1350 = vld [vmem:[%s11 + $0x24] sm:$0xff]
  %v1351 = vld [vmem:[%s11 + $0x2c] sm:$0xff]
  %v1352 = vld [vmem:[%s11 + $0x34] sm:$0xf]
  %v1353 = vld [vmem:[%s11 + $0x38] sm:$0xff]
  %v1354 = vld [vmem:[%s11 + $0x40] sm:$0xff]
  %v1355 = vld [vmem:[%s11 + $0x48] sm:$0xff]
  %v1356 = vld [vmem:[%s11 + $0x50] sm:$0xf]
  %v1357 = vld [vmem:[%s11 + $0x54] sm:$0xff]
  %v1358 = vld [vmem:[%s11 + $0x5c] sm:$0xff]
  %v1359 = vld [vmem:[%s11 + $0x64] sm:$0xff]
  %v1360 = vld [vmem:[%s11 + $0x6c] sm:$0xf]
  %v1361 = vld [vmem:[%s11 + $0x70] sm:$0xff]
  %v1362 = vld [vmem:[%s11 + $0x78] sm:$0xff]
  %v1363 = vld [vmem:[%s11 + $0x80] sm:$0xff]
  %v1364 = vld [vmem:[%s11 + $0x88] sm:$0xf]
  %v1365 = vld [vmem:[%s11 + $0x8c] sm:$0xff]
  %v1366 = vld [vmem:[%s11 + $0x94] sm:$0xff]
  %v1367 = vld [vmem:[%s11 + $0x9c] sm:$0xff]
  %v1368 = vld [vmem:[%s11 + $0xa4] sm:$0xf]
  %v1369 = vld [vmem:[%s11 + $0xa8] sm:$0xff]
  %v1370 = vld [vmem:[%s11 + $0xb0] sm:$0xff]
  %v1371 = vld [vmem:[%s11 + $0xb8] sm:$0xff]
  %v1372 = vld [vmem:[%s11 + $0xc0] sm:$0xf]
  %v1373 = vld [vmem:[%s11 + $0xc4] sm:$0xff]
  %v1374 = vld [vmem:[%s11 + $0xcc] sm:$0xff]
  %v1375 = vld [vmem:[%s11 + $0xd4] sm:$0xff]
  %v1376 = vld [vmem:[%s11 + $0xdc] sm:$0xf]
  %v1377 = vld [vmem:[%s11 + $0xe0] sm:$0xff]
  %v1378 = vld [vmem:[%s11 + $0xe8] sm:$0xff]
  %v1379 = vld [vmem:[%s11 + $0xf0] sm:$0xff]
  %v1380 = vld [vmem:[%s11 + $0xf8] sm:$0xf]
  %v1381 = vld [vmem:[%s11 + $0xfc] sm:$0xff]
  %v1382 = vld [vmem:[%s11 + $0x104] sm:$0xff]
  %v1383 = vld [vmem:[%s11 + $0x10c] sm:$0xff]
  %v1384 = vld [vmem:[%s11 + $0x114] sm:$0xf]
  %v1385 = vld [vmem:[%s11 + $0x118] sm:$0xff]
  %v1386 = vld [vmem:[%s11 + $0x120] sm:$0xff]
  %v1387 = vld [vmem:[%s11 + $0x128] sm:$0xff]
  %v1388 = vld [vmem:[%s11 + $0x130] sm:$0xf]
  %v1389 = vld [vmem:[%s11 + $0x134] sm:$0xff]
  %v1390 = vld [vmem:[%s11 + $0x13c] sm:$0xff]
  %v1391 = vld [vmem:[%s11 + $0x144] sm:$0xff]
  %v1392 = vld [vmem:[%s11 + $0x14c] sm:$0xf]
  %v1393 = vld [vmem:[%s11 + $0x150] sm:$0xff]
  %v1394 = vld [vmem:[%s11 + $0x158] sm:$0xff]
  %v1395 = vld [vmem:[%s11 + $0x160] sm:$0xff]
  %v1396 = vld [vmem:[%s11 + $0x168] sm:$0xf]
  %v1397 = vld [vmem:[%s11 + $0x16c] sm:$0xff]
  %v1398 = vld [vmem:[%s11 + $0x174] sm:$0xff]
  %v1399 = vld [vmem:[%s11 + $0x17c] sm:$0xff]
  %v1400 = vld [vmem:[%s11 + $0x184] sm:$0xf]
  %v1401 = vld [vmem:[%s11 + $0x188] sm:$0xff]
  %v1402 = vld [vmem:[%s11 + $0x190] sm:$0xff]
  %v1403 = vld [vmem:[%s11 + $0x198] sm:$0xff]
  %v1404 = vld [vmem:[%s11 + $0x1a0] sm:$0xf]
  %v1405 = vld [vmem:[%s11 + $0x1a4] sm:$0xff]
  %v1406 = vld [vmem:[%s11 + $0x1ac] sm:$0xff]
  %v1407 = vld [vmem:[%s11 + $0x1b4] sm:$0xff]
  %v1408 = vld [vmem:[%s11 + $0x1bc] sm:$0xf]
  %v1409 = vld [vmem:[%s11 + $0x1c0] sm:$0xff]
  %v1410 = vld [vmem:[%s11 + $0x1c8] sm:$0xff]
  %v1411 = vld [vmem:[%s11 + $0x1d0] sm:$0xff]
  %v1412 = vld [vmem:[%s11 + $0x1d8] sm:$0xf]
  %v1413 = vld [vmem:[%s11 + $0x1dc] sm:$0xff]
  %v1414 = vld [vmem:[%s11 + $0x1e4] sm:$0xff]
  %v1415 = vld [vmem:[%s11 + $0x1ec] sm:$0xff]
  %v1416 = vld [vmem:[%s11 + $0x1f4] sm:$0xf]
  %v1417 = vld [vmem:[%s11 + $0x1f8] sm:$0xff]
  %v1418 = vld [vmem:[%s11 + $0x200] sm:$0xff]
  %v1419 = vld [vmem:[%s11 + $0x208] sm:$0xff]
  %v1420 = vld [vmem:[%s11 + $0x210] sm:$0xf]
  %v1421 = vld [vmem:[%s11 + $0x214] sm:$0xff]
  %v1422 = vld [vmem:[%s11 + $0x21c] sm:$0xff]
  %v1423 = vld [vmem:[%s11 + $0x224] sm:$0xff]
  %v1424 = vld [vmem:[%s11 + $0x22c] sm:$0xf]
  %v1425 = vld [vmem:[%s11 + $0x230] sm:$0xff]
  %v1426 = vld [vmem:[%s11 + $0x238] sm:$0xff]
  %v1427 = vld [vmem:[%s11 + $0x240] sm:$0xff]
  %v1428 = vld [vmem:[%s11 + $0x248] sm:$0xf]
  %v1429 = vld [vmem:[%s11 + $0x24c] sm:$0xff]
  %v1430 = vld [vmem:[%s11 + $0x254] sm:$0xff]
  %v1431 = vld [vmem:[%s11 + $0x25c] sm:$0xff]
  %v1432 = vld [vmem:[%s11 + $0x264] sm:$0xf]
  %v1433 = vld [vmem:[%s11 + $0x268] sm:$0xff]
  %v1434 = vld [vmem:[%s11 + $0x270] sm:$0xff]
  %v1435 = vld [vmem:[%s11 + $0x278] sm:$0xff]
  %v1436 = vld [vmem:[%s11 + $0x280] sm:$0xf]
  %v1437 = vld [vmem:[%s11 + $0x284] sm:$0xff]
  %v1438 = vld [vmem:[%s11 + $0x28c] sm:$0xff]
  %v1439 = vld [vmem:[%s11 + $0x294] sm:$0xff]
  %v1440 = vld [vmem:[%s11 + $0x29c] sm:$0xf]
  %v1441 = vld [vmem:[%s11 + $0x2a0] sm:$0xff]
  %v1442 = vld [vmem:[%s11 + $0x2a8] sm:$0xff]
  %v1443 = vld [vmem:[%s11 + $0x2b0] sm:$0xff]
  %v1444 = vld [vmem:[%s11 + $0x2b8] sm:$0xf]
  %v1445 = vld [vmem:[%s11 + $0x2bc] sm:$0xff]
  %v1446 = vld [vmem:[%s11 + $0x2c4] sm:$0xff]
  %v1447 = vld [vmem:[%s11 + $0x2cc] sm:$0xff]
  %v1448 = vld [vmem:[%s11 + $0x2d4] sm:$0xf]
  %v1449 = vld [vmem:[%s11 + $0x2d8] sm:$0xff]
  %v1450 = vld [vmem:[%s11 + $0x2e0] sm:$0xff]
  %v1451 = vld [vmem:[%s11 + $0x2e8] sm:$0xff]
  %v1452 = vld [vmem:[%s11 + $0x2f0] sm:$0xf]
  %v1453 = vld [vmem:[%s11 + $0x2f4] sm:$0xff]
  %v1454 = vld [vmem:[%s11 + $0x2fc] sm:$0xff]
  %v1455 = vld [vmem:[%s11 + $0x304] sm:$0xff]
  %v1456 = vld [vmem:[%s11 + $0x30c] sm:$0xf]
  %v1457 = vld [vmem:[%s11 + $0x310] sm:$0xff]
  %v1458 = vld [vmem:[%s11 + $0x318] sm:$0xff]
  %v1459 = vld [vmem:[%s11 + $0x320] sm:$0xff]
  %v1460 = vld [vmem:[%s11 + $0x328] sm:$0xf]
  %v1461 = vld [vmem:[%s11 + $0x32c] sm:$0xff]
  %v1462 = vld [vmem:[%s11 + $0x334] sm:$0xff]
  %v1463 = vld [vmem:[%s11 + $0x33c] sm:$0xff]
  %v1464 = vld [vmem:[%s11 + $0x344] sm:$0xf]
  %v1465 = vld [vmem:[%s11 + $0x348] sm:$0xff]
  %v1466 = vld [vmem:[%s11 + $0x350] sm:$0xff]
  %v1467 = vld [vmem:[%s11 + $0x358] sm:$0xff]
  %v1468 = vld [vmem:[%s11 + $0x360] sm:$0xf]
  %v1469 = vld [vmem:[%s11 + $0x364] sm:$0xff]
  %v1470 = vld [vmem:[%s11 + $0x36c] sm:$0xff]
  %v1471 = vld [vmem:[%s11 + $0x374] sm:$0xff]
  %v1472 = vld [vmem:[%s11 + $0x37c] sm:$0xf]
  %v1473 = vld [vmem:[%s12] sm:$0x7f]
  %v1475 = vlaneseq
  %v1476 = vshrl.u32 %v1475, 7
  %v1477 = vsub.s32 0, %v1476
  %v1478 = vrot.slane %v1473, %v1477
  %v1479 = vlaneseq
  %v1480 = vshrl.u32 %v1479, 7
  %v1481 = vsub.s32 1, %v1480
  %v1482 = vrot.slane %v1473, %v1481
  %v1483 = vlaneseq
  %v1484 = vshrl.u32 %v1483, 7
  %v1485 = vsub.s32 2, %v1484
  %v1486 = vrot.slane %v1473, %v1485
  %v1487 = vlaneseq
  %v1488 = vshrl.u32 %v1487, 7
  %v1489 = vsub.s32 3, %v1488
  %v1490 = vrot.slane %v1473, %v1489
  %v1491 = vlaneseq
  %v1492 = vshrl.u32 %v1491, 7
  %v1493 = vsub.s32 4, %v1492
  %v1494 = vrot.slane %v1473, %v1493
  %v1495 = vlaneseq
  %v1496 = vshrl.u32 %v1495, 7
  %v1497 = vsub.s32 5, %v1496
  %v1498 = vrot.slane %v1473, %v1497
  %v1499 = vlaneseq
  %v1500 = vshrl.u32 %v1499, 7
  %v1501 = vsub.s32 6, %v1500
  %v1502 = vrot.slane %v1473, %v1501
  %v1638 = vunpack.c.l.b16 %v1345
  %v1639 = vunpack.c.h.b16 %v1345
  %v1640 = vunpack.c.l.b16 %v1346
  %v1641 = vunpack.c.h.b16 %v1346
  %v1642 = vunpack.c.l.b16 %v1347
  %v1643 = vunpack.c.h.b16 %v1347
  %v1644 = vunpack.c.l.b16 %v1348
  %v1645 = vunpack.c.l.b16 %v1349
  %v1646 = vunpack.c.h.b16 %v1349
  %v1647 = vunpack.c.l.b16 %v1350
  %v1648 = vunpack.c.h.b16 %v1350
  %v1649 = vunpack.c.l.b16 %v1351
  %v1650 = vunpack.c.h.b16 %v1351
  %v1651 = vunpack.c.l.b16 %v1352
  %v1652 = vunpack.c.l.b16 %v1353
  %v1653 = vunpack.c.h.b16 %v1353
  %v1654 = vunpack.c.l.b16 %v1354
  %v1655 = vunpack.c.h.b16 %v1354
  %v1656 = vunpack.c.l.b16 %v1355
  %v1657 = vunpack.c.h.b16 %v1355
  %v1658 = vunpack.c.l.b16 %v1356
  %v1659 = vunpack.c.l.b16 %v1357
  %v1660 = vunpack.c.h.b16 %v1357
  %v1661 = vunpack.c.l.b16 %v1358
  %v1662 = vunpack.c.h.b16 %v1358
  %v1663 = vunpack.c.l.b16 %v1359
  %v1664 = vunpack.c.h.b16 %v1359
  %v1665 = vunpack.c.l.b16 %v1360
  %v1666 = vunpack.c.l.b16 %v1361
  %v1667 = vunpack.c.h.b16 %v1361
  %v1668 = vunpack.c.l.b16 %v1362
  %v1669 = vunpack.c.h.b16 %v1362
  %v1670 = vunpack.c.l.b16 %v1363
  %v1671 = vunpack.c.h.b16 %v1363
  %v1672 = vunpack.c.l.b16 %v1364
  %v1673 = vunpack.c.l.b16 %v1365
  %v1674 = vunpack.c.h.b16 %v1365
  %v1675 = vunpack.c.l.b16 %v1366
  %v1676 = vunpack.c.h.b16 %v1366
  %v1677 = vunpack.c.l.b16 %v1367
  %v1678 = vunpack.c.h.b16 %v1367
  %v1679 = vunpack.c.l.b16 %v1368
  %v1680 = vunpack.c.l.b16 %v1369
  %v1681 = vunpack.c.h.b16 %v1369
  %v1682 = vunpack.c.l.b16 %v1370
  %v1683 = vunpack.c.h.b16 %v1370
  %v1684 = vunpack.c.l.b16 %v1371
  %v1685 = vunpack.c.h.b16 %v1371
  %v1686 = vunpack.c.l.b16 %v1372
  %v1687 = vunpack.c.l.b16 %v1373
  %v1688 = vunpack.c.h.b16 %v1373
  %v1689 = vunpack.c.l.b16 %v1374
  %v1690 = vunpack.c.h.b16 %v1374
  %v1691 = vunpack.c.l.b16 %v1375
  %v1692 = vunpack.c.h.b16 %v1375
  %v1693 = vunpack.c.l.b16 %v1376
  %v1694 = vunpack.c.l.b16 %v1377
  %v1695 = vunpack.c.h.b16 %v1377
  %v1696 = vunpack.c.l.b16 %v1378
  %v1697 = vunpack.c.h.b16 %v1378
  %v1698 = vunpack.c.l.b16 %v1379
  %v1699 = vunpack.c.h.b16 %v1379
  %v1700 = vunpack.c.l.b16 %v1380
  %v1701 = vunpack.c.l.b16 %v1381
  %v1702 = vunpack.c.h.b16 %v1381
  %v1703 = vunpack.c.l.b16 %v1382
  %v1704 = vunpack.c.h.b16 %v1382
  %v1705 = vunpack.c.l.b16 %v1383
  %v1706 = vunpack.c.h.b16 %v1383
  %v1707 = vunpack.c.l.b16 %v1384
  %v1708 = vunpack.c.l.b16 %v1385
  %v1709 = vunpack.c.h.b16 %v1385
  %v1710 = vunpack.c.l.b16 %v1386
  %v1711 = vunpack.c.h.b16 %v1386
  %v1712 = vunpack.c.l.b16 %v1387
  %v1713 = vunpack.c.h.b16 %v1387
  %v1714 = vunpack.c.l.b16 %v1388
  %v1715 = vunpack.c.l.b16 %v1389
  %v1716 = vunpack.c.h.b16 %v1389
  %v1717 = vunpack.c.l.b16 %v1390
  %v1718 = vunpack.c.h.b16 %v1390
  %v1719 = vunpack.c.l.b16 %v1391
  %v1720 = vunpack.c.h.b16 %v1391
  %v1721 = vunpack.c.l.b16 %v1392
  %v1722 = vunpack.c.l.b16 %v1393
  %v1723 = vunpack.c.h.b16 %v1393
  %v1724 = vunpack.c.l.b16 %v1394
  %v1725 = vunpack.c.h.b16 %v1394
  %v1726 = vunpack.c.l.b16 %v1395
  %v1727 = vunpack.c.h.b16 %v1395
  %v1728 = vunpack.c.l.b16 %v1396
  %v1729 = vunpack.c.l.b16 %v1397
  %v1730 = vunpack.c.h.b16 %v1397
  %v1731 = vunpack.c.l.b16 %v1398
  %v1732 = vunpack.c.h.b16 %v1398
  %v1733 = vunpack.c.l.b16 %v1399
  %v1734 = vunpack.c.h.b16 %v1399
  %v1735 = vunpack.c.l.b16 %v1400
  %v1736 = vunpack.c.l.b16 %v1401
  %v1737 = vunpack.c.h.b16 %v1401
  %v1738 = vunpack.c.l.b16 %v1402
  %v1739 = vunpack.c.h.b16 %v1402
  %v1740 = vunpack.c.l.b16 %v1403
  %v1741 = vunpack.c.h.b16 %v1403
  %v1742 = vunpack.c.l.b16 %v1404
  %v1743 = vunpack.c.l.b16 %v1405
  %v1744 = vunpack.c.h.b16 %v1405
  %v1745 = vunpack.c.l.b16 %v1406
  %v1746 = vunpack.c.h.b16 %v1406
  %v1747 = vunpack.c.l.b16 %v1407
  %v1748 = vunpack.c.h.b16 %v1407
  %v1749 = vunpack.c.l.b16 %v1408
  %v1750 = vunpack.c.l.b16 %v1409
  %v1751 = vunpack.c.h.b16 %v1409
  %v1752 = vunpack.c.l.b16 %v1410
  %v1753 = vunpack.c.h.b16 %v1410
  %v1754 = vunpack.c.l.b16 %v1411
  %v1755 = vunpack.c.h.b16 %v1411
  %v1756 = vunpack.c.l.b16 %v1412
  %v1757 = vunpack.c.l.b16 %v1413
  %v1758 = vunpack.c.h.b16 %v1413
  %v1759 = vunpack.c.l.b16 %v1414
  %v1760 = vunpack.c.h.b16 %v1414
  %v1761 = vunpack.c.l.b16 %v1415
  %v1762 = vunpack.c.h.b16 %v1415
  %v1763 = vunpack.c.l.b16 %v1416
  %v1764 = vunpack.c.l.b16 %v1417
  %v1765 = vunpack.c.h.b16 %v1417
  %v1766 = vunpack.c.l.b16 %v1418
  %v1767 = vunpack.c.h.b16 %v1418
  %v1768 = vunpack.c.l.b16 %v1419
  %v1769 = vunpack.c.h.b16 %v1419
  %v1770 = vunpack.c.l.b16 %v1420
  %v1771 = vunpack.c.l.b16 %v1421
  %v1772 = vunpack.c.h.b16 %v1421
  %v1773 = vunpack.c.l.b16 %v1422
  %v1774 = vunpack.c.h.b16 %v1422
  %v1775 = vunpack.c.l.b16 %v1423
  %v1776 = vunpack.c.h.b16 %v1423
  %v1777 = vunpack.c.l.b16 %v1424
  %v1778 = vunpack.c.l.b16 %v1425
  %v1779 = vunpack.c.h.b16 %v1425
  %v1780 = vunpack.c.l.b16 %v1426
  %v1781 = vunpack.c.h.b16 %v1426
  %v1782 = vunpack.c.l.b16 %v1427
  %v1783 = vunpack.c.h.b16 %v1427
  %v1784 = vunpack.c.l.b16 %v1428
  %v1785 = vunpack.c.l.b16 %v1429
  %v1786 = vunpack.c.h.b16 %v1429
  %v1787 = vunpack.c.l.b16 %v1430
  %v1788 = vunpack.c.h.b16 %v1430
  %v1789 = vunpack.c.l.b16 %v1431
  %v1790 = vunpack.c.h.b16 %v1431
  %v1791 = vunpack.c.l.b16 %v1432
  %v1792 = vunpack.c.l.b16 %v1433
  %v1793 = vunpack.c.h.b16 %v1433
  %v1794 = vunpack.c.l.b16 %v1434
  %v1795 = vunpack.c.h.b16 %v1434
  %v1796 = vunpack.c.l.b16 %v1435
  %v1797 = vunpack.c.h.b16 %v1435
  %v1798 = vunpack.c.l.b16 %v1436
  %v1799 = vunpack.c.l.b16 %v1437
  %v1800 = vunpack.c.h.b16 %v1437
  %v1801 = vunpack.c.l.b16 %v1438
  %v1802 = vunpack.c.h.b16 %v1438
  %v1803 = vunpack.c.l.b16 %v1439
  %v1804 = vunpack.c.h.b16 %v1439
  %v1805 = vunpack.c.l.b16 %v1440
  %v1806 = vunpack.c.l.b16 %v1441
  %v1807 = vunpack.c.h.b16 %v1441
  %v1808 = vunpack.c.l.b16 %v1442
  %v1809 = vunpack.c.h.b16 %v1442
  %v1810 = vunpack.c.l.b16 %v1443
  %v1811 = vunpack.c.h.b16 %v1443
  %v1812 = vunpack.c.l.b16 %v1444
  %v1813 = vunpack.c.l.b16 %v1445
  %v1814 = vunpack.c.h.b16 %v1445
  %v1815 = vunpack.c.l.b16 %v1446
  %v1816 = vunpack.c.h.b16 %v1446
  %v1817 = vunpack.c.l.b16 %v1447
  %v1818 = vunpack.c.h.b16 %v1447
  %v1819 = vunpack.c.l.b16 %v1448
  %v1820 = vunpack.c.l.b16 %v1449
  %v1821 = vunpack.c.h.b16 %v1449
  %v1822 = vunpack.c.l.b16 %v1450
  %v1823 = vunpack.c.h.b16 %v1450
  %v1824 = vunpack.c.l.b16 %v1451
  %v1825 = vunpack.c.h.b16 %v1451
  %v1826 = vunpack.c.l.b16 %v1452
  %v1827 = vunpack.c.l.b16 %v1453
  %v1828 = vunpack.c.h.b16 %v1453
  %v1829 = vunpack.c.l.b16 %v1454
  %v1830 = vunpack.c.h.b16 %v1454
  %v1831 = vunpack.c.l.b16 %v1455
  %v1832 = vunpack.c.h.b16 %v1455
  %v1833 = vunpack.c.l.b16 %v1456
  %v1834 = vunpack.c.l.b16 %v1457
  %v1835 = vunpack.c.h.b16 %v1457
  %v1836 = vunpack.c.l.b16 %v1458
  %v1837 = vunpack.c.h.b16 %v1458
  %v1838 = vunpack.c.l.b16 %v1459
  %v1839 = vunpack.c.h.b16 %v1459
  %v1840 = vunpack.c.l.b16 %v1460
  %v1841 = vunpack.c.l.b16 %v1461
  %v1842 = vunpack.c.h.b16 %v1461
  %v1843 = vunpack.c.l.b16 %v1462
  %v1844 = vunpack.c.h.b16 %v1462
  %v1845 = vunpack.c.l.b16 %v1463
  %v1846 = vunpack.c.h.b16 %v1463
  %v1847 = vunpack.c.l.b16 %v1464
  %v1848 = vunpack.c.l.b16 %v1465
  %v1849 = vunpack.c.h.b16 %v1465
  %v1850 = vunpack.c.l.b16 %v1466
  %v1851 = vunpack.c.h.b16 %v1466
  %v1852 = vunpack.c.l.b16 %v1467
  %v1853 = vunpack.c.h.b16 %v1467
  %v1854 = vunpack.c.l.b16 %v1468
  %v1855 = vunpack.c.l.b16 %v1469
  %v1856 = vunpack.c.h.b16 %v1469
  %v1857 = vunpack.c.l.b16 %v1470
  %v1858 = vunpack.c.h.b16 %v1470
  %v1859 = vunpack.c.l.b16 %v1471
  %v1860 = vunpack.c.h.b16 %v1471
  %v1861 = vunpack.c.l.b16 %v1472
  %v1862 = vpack.c.b16 %v1645, %v1638
  %v1863 = vpack.c.b16 %v1646, %v1639
  %v1864 = vpack.c.b16 %v1647, %v1640
  %v1865 = vpack.c.b16 %v1648, %v1641
  %v1866 = vpack.c.b16 %v1649, %v1642
  %v1867 = vpack.c.b16 %v1650, %v1643
  %v1868 = vpack.c.b16 %v1651, %v1644
  %v1869 = vpack.c.b16 %v1659, %v1652
  %v1870 = vpack.c.b16 %v1660, %v1653
  %v1871 = vpack.c.b16 %v1661, %v1654
  %v1872 = vpack.c.b16 %v1662, %v1655
  %v1873 = vpack.c.b16 %v1663, %v1656
  %v1874 = vpack.c.b16 %v1664, %v1657
  %v1875 = vpack.c.b16 %v1665, %v1658
  %v1876 = vpack.c.b16 %v1673, %v1666
  %v1877 = vpack.c.b16 %v1674, %v1667
  %v1878 = vpack.c.b16 %v1675, %v1668
  %v1879 = vpack.c.b16 %v1676, %v1669
  %v1880 = vpack.c.b16 %v1677, %v1670
  %v1881 = vpack.c.b16 %v1678, %v1671
  %v1882 = vpack.c.b16 %v1679, %v1672
  %v1883 = vpack.c.b16 %v1687, %v1680
  %v1884 = vpack.c.b16 %v1688, %v1681
  %v1885 = vpack.c.b16 %v1689, %v1682
  %v1886 = vpack.c.b16 %v1690, %v1683
  %v1887 = vpack.c.b16 %v1691, %v1684
  %v1888 = vpack.c.b16 %v1692, %v1685
  %v1889 = vpack.c.b16 %v1693, %v1686
  %v1890 = vpack.c.b16 %v1701, %v1694
  %v1891 = vpack.c.b16 %v1702, %v1695
  %v1892 = vpack.c.b16 %v1703, %v1696
  %v1893 = vpack.c.b16 %v1704, %v1697
  %v1894 = vpack.c.b16 %v1705, %v1698
  %v1895 = vpack.c.b16 %v1706, %v1699
  %v1896 = vpack.c.b16 %v1707, %v1700
  %v1897 = vpack.c.b16 %v1715, %v1708
  %v1898 = vpack.c.b16 %v1716, %v1709
  %v1899 = vpack.c.b16 %v1717, %v1710
  %v1900 = vpack.c.b16 %v1718, %v1711
  %v1901 = vpack.c.b16 %v1719, %v1712
  %v1902 = vpack.c.b16 %v1720, %v1713
  %v1903 = vpack.c.b16 %v1721, %v1714
  %v1904 = vpack.c.b16 %v1729, %v1722
  %v1905 = vpack.c.b16 %v1730, %v1723
  %v1906 = vpack.c.b16 %v1731, %v1724
  %v1907 = vpack.c.b16 %v1732, %v1725
  %v1908 = vpack.c.b16 %v1733, %v1726
  %v1909 = vpack.c.b16 %v1734, %v1727
  %v1910 = vpack.c.b16 %v1735, %v1728
  %v1911 = vpack.c.b16 %v1743, %v1736
  %v1912 = vpack.c.b16 %v1744, %v1737
  %v1913 = vpack.c.b16 %v1745, %v1738
  %v1914 = vpack.c.b16 %v1746, %v1739
  %v1915 = vpack.c.b16 %v1747, %v1740
  %v1916 = vpack.c.b16 %v1748, %v1741
  %v1917 = vpack.c.b16 %v1749, %v1742
  %v1918 = vpack.c.b16 %v1757, %v1750
  %v1919 = vpack.c.b16 %v1758, %v1751
  %v1920 = vpack.c.b16 %v1759, %v1752
  %v1921 = vpack.c.b16 %v1760, %v1753
  %v1922 = vpack.c.b16 %v1761, %v1754
  %v1923 = vpack.c.b16 %v1762, %v1755
  %v1924 = vpack.c.b16 %v1763, %v1756
  %v1925 = vpack.c.b16 %v1771, %v1764
  %v1926 = vpack.c.b16 %v1772, %v1765
  %v1927 = vpack.c.b16 %v1773, %v1766
  %v1928 = vpack.c.b16 %v1774, %v1767
  %v1929 = vpack.c.b16 %v1775, %v1768
  %v1930 = vpack.c.b16 %v1776, %v1769
  %v1931 = vpack.c.b16 %v1777, %v1770
  %v1932 = vpack.c.b16 %v1785, %v1778
  %v1933 = vpack.c.b16 %v1786, %v1779
  %v1934 = vpack.c.b16 %v1787, %v1780
  %v1935 = vpack.c.b16 %v1788, %v1781
  %v1936 = vpack.c.b16 %v1789, %v1782
  %v1937 = vpack.c.b16 %v1790, %v1783
  %v1938 = vpack.c.b16 %v1791, %v1784
  %v1939 = vpack.c.b16 %v1799, %v1792
  %v1940 = vpack.c.b16 %v1800, %v1793
  %v1941 = vpack.c.b16 %v1801, %v1794
  %v1942 = vpack.c.b16 %v1802, %v1795
  %v1943 = vpack.c.b16 %v1803, %v1796
  %v1944 = vpack.c.b16 %v1804, %v1797
  %v1945 = vpack.c.b16 %v1805, %v1798
  %v1946 = vpack.c.b16 %v1813, %v1806
  %v1947 = vpack.c.b16 %v1814, %v1807
  %v1948 = vpack.c.b16 %v1815, %v1808
  %v1949 = vpack.c.b16 %v1816, %v1809
  %v1950 = vpack.c.b16 %v1817, %v1810
  %v1951 = vpack.c.b16 %v1818, %v1811
  %v1952 = vpack.c.b16 %v1819, %v1812
  %v1953 = vpack.c.b16 %v1827, %v1820
  %v1954 = vpack.c.b16 %v1828, %v1821
  %v1955 = vpack.c.b16 %v1829, %v1822
  %v1956 = vpack.c.b16 %v1830, %v1823
  %v1957 = vpack.c.b16 %v1831, %v1824
  %v1958 = vpack.c.b16 %v1832, %v1825
  %v1959 = vpack.c.b16 %v1833, %v1826
  %v1960 = vpack.c.b16 %v1841, %v1834
  %v1961 = vpack.c.b16 %v1842, %v1835
  %v1962 = vpack.c.b16 %v1843, %v1836
  %v1963 = vpack.c.b16 %v1844, %v1837
  %v1964 = vpack.c.b16 %v1845, %v1838
  %v1965 = vpack.c.b16 %v1846, %v1839
  %v1966 = vpack.c.b16 %v1847, %v1840
  %v1967 = vpack.c.b16 %v1855, %v1848
  %v1968 = vpack.c.b16 %v1856, %v1849
  %v1969 = vpack.c.b16 %v1857, %v1850
  %v1970 = vpack.c.b16 %v1858, %v1851
  %v1971 = vpack.c.b16 %v1859, %v1852
  %v1972 = vpack.c.b16 %v1860, %v1853
  %v1973 = vpack.c.b16 %v1861, %v1854
  %2086 = vmatprep.subr.bf16.mxu0 %v1863
  %2087 = vmatpush1.bf16.msra.mxu0 %v1862
  %2088 = vmatprep.subr.bf16.mxu0 %v1870
  %2089 = vmatpush1.bf16.msra.mxu0 %v1869
  %2090 = vmatprep.subr.bf16.mxu0 %v1877
  %2091 = vmatpush1.bf16.msra.mxu0 %v1876
  %2092 = vmatprep.subr.bf16.mxu0 %v1884
  %2093 = vmatpush1.bf16.msra.mxu0 %v1883
  %2094 = vmatprep.subr.bf16.mxu0 %v1891
  %2095 = vmatpush1.bf16.msra.mxu0 %v1890
  %2096 = vmatprep.subr.bf16.mxu0 %v1898
  %2097 = vmatpush1.bf16.msra.mxu0 %v1897
  %2098 = vmatprep.subr.bf16.mxu0 %v1905
  %2099 = vmatpush1.bf16.msra.mxu0 %v1904
  %2100 = vmatprep.subr.bf16.mxu0 %v1912
  %2101 = vmatpush1.bf16.msra.mxu0 %v1911
  %2102 = vmatprep.subr.bf16.mxu0 %v1919
  %2103 = vmatpush1.bf16.msra.mxu0 %v1918
  %2104 = vmatprep.subr.bf16.mxu0 %v1926
  %2105 = vmatpush1.bf16.msra.mxu0 %v1925
  %2106 = vmatprep.subr.bf16.mxu0 %v1933
  %2107 = vmatpush1.bf16.msra.mxu0 %v1932
  %2108 = vmatprep.subr.bf16.mxu0 %v1940
  %2109 = vmatpush1.bf16.msra.mxu0 %v1939
  %2110 = vmatprep.subr.bf16.mxu0 %v1947
  %2111 = vmatpush1.bf16.msra.mxu0 %v1946
  %2112 = vmatprep.subr.bf16.mxu0 %v1954
  %2113 = vmatpush1.bf16.msra.mxu0 %v1953
  %2114 = vmatprep.subr.bf16.mxu0 %v1961
  %2115 = vmatpush1.bf16.msra.mxu0 %v1960
  %2116 = vmatprep.subr.bf16.mxu0 %v1968
  %2117 = vmatpush1.bf16.msra.mxu0 %v1967
  %2118 = vmatprep.mubr.bf16.mxu0 %v1344
  %2119 = vmatmul.mubr.bf16.gmra.mrb[0].mxu0 %v1343
  %v2120 = vpop.f32.mrb[0].mxu0
  %v2121 = vadd.f32 %v1478, %v2120
  %v2122 = vpop.f32.mrb[0].mxu0
  %v2123 = vadd.f32 %v1482, %v2122
  %v2124 = vpop.f32.mrb[0].mxu0
  %v2125 = vadd.f32 %v1478, %v2124
  %v2126 = vpop.f32.mrb[0].mxu0
  %v2127 = vadd.f32 %v1482, %v2126
  %2128 = vdwg.mxu0
  %2129 = vmatprep.subr.bf16.mxu0 %v1865
  %2130 = vmatpush1.bf16.msra.mxu0 %v1864
  %2131 = vmatprep.subr.bf16.mxu0 %v1872
  %2132 = vmatpush1.bf16.msra.mxu0 %v1871
  %2133 = vmatprep.subr.bf16.mxu0 %v1879
  %2134 = vmatpush1.bf16.msra.mxu0 %v1878
  %2135 = vmatprep.subr.bf16.mxu0 %v1886
  %2136 = vmatpush1.bf16.msra.mxu0 %v1885
  %2137 = vmatprep.subr.bf16.mxu0 %v1893
  %2138 = vmatpush1.bf16.msra.mxu0 %v1892
  %2139 = vmatprep.subr.bf16.mxu0 %v1900
  %2140 = vmatpush1.bf16.msra.mxu0 %v1899
  %2141 = vmatprep.subr.bf16.mxu0 %v1907
  %2142 = vmatpush1.bf16.msra.mxu0 %v1906
  %2143 = vmatprep.subr.bf16.mxu0 %v1914
  %2144 = vmatpush1.bf16.msra.mxu0 %v1913
  %2145 = vmatprep.subr.bf16.mxu0 %v1921
  %2146 = vmatpush1.bf16.msra.mxu0 %v1920
  %2147 = vmatprep.subr.bf16.mxu0 %v1928
  %2148 = vmatpush1.bf16.msra.mxu0 %v1927
  %2149 = vmatprep.subr.bf16.mxu0 %v1935
  %2150 = vmatpush1.bf16.msra.mxu0 %v1934
  %2151 = vmatprep.subr.bf16.mxu0 %v1942
  %2152 = vmatpush1.bf16.msra.mxu0 %v1941
  %2153 = vmatprep.subr.bf16.mxu0 %v1949
  %2154 = vmatpush1.bf16.msra.mxu0 %v1948
  %2155 = vmatprep.subr.bf16.mxu0 %v1956
  %2156 = vmatpush1.bf16.msra.mxu0 %v1955
  %2157 = vmatprep.subr.bf16.mxu0 %v1963
  %2158 = vmatpush1.bf16.msra.mxu0 %v1962
  %2159 = vmatprep.subr.bf16.mxu0 %v1970
  %2160 = vmatpush1.bf16.msra.mxu0 %v1969
  %2161 = vmatprep.mubr.bf16.mxu0 %v1344
  %2162 = vmatmul.mubr.bf16.gmra.mrb[0].mxu0 %v1343
  %v2163 = vpop.f32.mrb[0].mxu0
  %v2164 = vadd.f32 %v1486, %v2163
  %v2165 = vpop.f32.mrb[0].mxu0
  %v2166 = vadd.f32 %v1490, %v2165
  %v2167 = vpop.f32.mrb[0].mxu0
  %v2168 = vadd.f32 %v1486, %v2167
  %v2169 = vpop.f32.mrb[0].mxu0
  %v2170 = vadd.f32 %v1490, %v2169
  %2171 = vdwg.mxu0
  %2172 = vmatprep.subr.bf16.mxu0 %v1867
  %2173 = vmatpush1.bf16.msra.mxu0 %v1866
  %2174 = vmatprep.subr.bf16.mxu0 %v1874
  %2175 = vmatpush1.bf16.msra.mxu0 %v1873
  %2176 = vmatprep.subr.bf16.mxu0 %v1881
  %2177 = vmatpush1.bf16.msra.mxu0 %v1880
  %2178 = vmatprep.subr.bf16.mxu0 %v1888
  %2179 = vmatpush1.bf16.msra.mxu0 %v1887
  %2180 = vmatprep.subr.bf16.mxu0 %v1895
  %2181 = vmatpush1.bf16.msra.mxu0 %v1894
  %2182 = vmatprep.subr.bf16.mxu0 %v1902
  %2183 = vmatpush1.bf16.msra.mxu0 %v1901
  %2184 = vmatprep.subr.bf16.mxu0 %v1909
  %2185 = vmatpush1.bf16.msra.mxu0 %v1908
  %2186 = vmatprep.subr.bf16.mxu0 %v1916
  %2187 = vmatpush1.bf16.msra.mxu0 %v1915
  %2188 = vmatprep.subr.bf16.mxu0 %v1923
  %2189 = vmatpush1.bf16.msra.mxu0 %v1922
  %2190 = vmatprep.subr.bf16.mxu0 %v1930
  %2191 = vmatpush1.bf16.msra.mxu0 %v1929
  %2192 = vmatprep.subr.bf16.mxu0 %v1937
  %2193 = vmatpush1.bf16.msra.mxu0 %v1936
  %2194 = vmatprep.subr.bf16.mxu0 %v1944
  %2195 = vmatpush1.bf16.msra.mxu0 %v1943
  %2196 = vmatprep.subr.bf16.mxu0 %v1951
  %2197 = vmatpush1.bf16.msra.mxu0 %v1950
  %2198 = vmatprep.subr.bf16.mxu0 %v1958
  %2199 = vmatpush1.bf16.msra.mxu0 %v1957
  %2200 = vmatprep.subr.bf16.mxu0 %v1965
  %2201 = vmatpush1.bf16.msra.mxu0 %v1964
  %2202 = vmatprep.subr.bf16.mxu0 %v1972
  %2203 = vmatpush1.bf16.msra.mxu0 %v1971
  %2204 = vmatprep.mubr.bf16.mxu0 %v1344
  %2205 = vmatmul.mubr.bf16.gmra.mrb[0].mxu0 %v1343
  %v2206 = vpop.f32.mrb[0].mxu0
  %v2207 = vadd.f32 %v1494, %v2206
  %v2208 = vpop.f32.mrb[0].mxu0
  %v2209 = vadd.f32 %v1498, %v2208
  %v2210 = vpop.f32.mrb[0].mxu0
  %v2211 = vadd.f32 %v1494, %v2210
  %v2212 = vpop.f32.mrb[0].mxu0
  %v2213 = vadd.f32 %v1498, %v2212
  %2214 = vdwg.mxu0
  %2215 = vmatprep.subr.bf16.mxu0 0
  %2216 = vmatpush1.bf16.msra.mxu0 %v1868
  %2217 = vmatprep.subr.bf16.mxu0 0
  %2218 = vmatpush1.bf16.msra.mxu0 %v1875
  %2219 = vmatprep.subr.bf16.mxu0 0
  %2220 = vmatpush1.bf16.msra.mxu0 %v1882
  %2221 = vmatprep.subr.bf16.mxu0 0
  %2222 = vmatpush1.bf16.msra.mxu0 %v1889
  %2223 = vmatprep.subr.bf16.mxu0 0
  %2224 = vmatpush1.bf16.msra.mxu0 %v1896
  %2225 = vmatprep.subr.bf16.mxu0 0
  %2226 = vmatpush1.bf16.msra.mxu0 %v1903
  %2227 = vmatprep.subr.bf16.mxu0 0
  %2228 = vmatpush1.bf16.msra.mxu0 %v1910
  %2229 = vmatprep.subr.bf16.mxu0 0
  %2230 = vmatpush1.bf16.msra.mxu0 %v1917
  %2231 = vmatprep.subr.bf16.mxu0 0
  %2232 = vmatpush1.bf16.msra.mxu0 %v1924
  %2233 = vmatprep.subr.bf16.mxu0 0
  %2234 = vmatpush1.bf16.msra.mxu0 %v1931
  %2235 = vmatprep.subr.bf16.mxu0 0
  %2236 = vmatpush1.bf16.msra.mxu0 %v1938
  %2237 = vmatprep.subr.bf16.mxu0 0
  %2238 = vmatpush1.bf16.msra.mxu0 %v1945
  %2239 = vmatprep.subr.bf16.mxu0 0
  %2240 = vmatpush1.bf16.msra.mxu0 %v1952
  %2241 = vmatprep.subr.bf16.mxu0 0
  %2242 = vmatpush1.bf16.msra.mxu0 %v1959
  %2243 = vmatprep.subr.bf16.mxu0 0
  %2244 = vmatpush1.bf16.msra.mxu0 %v1966
  %2245 = vmatprep.subr.bf16.mxu0 0
  %2246 = vmatpush1.bf16.msra.mxu0 %v1973
  %2247 = vmatprep.mubr.bf16.mxu0 %v1344
  %2248 = vmatmul.mubr.bf16.gmra.mrb[0].mxu0 %v1343
  %v2249 = vpop.f32.mrb[0].mxu0
  %v2250 = vadd.f32 %v1502, %v2249
  %v2251 = vpop.f32.mrb[0].mxu0
  %v2252 = vpop.f32.mrb[0].mxu0
  %v2253 = vadd.f32 %v1502, %v2252
  %v2254 = vpop.f32.mrb[0].mxu0
  %2255 = vdwg.mxu0
  %v2256 = vsub.f32 0.0, %v2121
  %v2257 = vsub.f32 0.0, %v2123
  %v2258 = vsub.f32 0.0, %v2164
  %v2259 = vsub.f32 0.0, %v2166
  %v2260 = vsub.f32 0.0, %v2207
  %v2261 = vsub.f32 0.0, %v2209
  %v2262 = vsub.f32 0.0, %v2250
  %v2263 = vsub.f32 0.0, %v2125
  %v2264 = vsub.f32 0.0, %v2127
  %v2265 = vsub.f32 0.0, %v2168
  %v2266 = vsub.f32 0.0, %v2170
  %v2267 = vsub.f32 0.0, %v2211
  %v2268 = vsub.f32 0.0, %v2213
  %v2269 = vsub.f32 0.0, %v2253
  %v2270 = vmul.f32 %v2256, 1.442695
  %v2271 = vpow.pop %v2270
  %v2272 = vmul.f32 %v2257, 1.442695
  %v2273 = vpow.pop %v2272
  %v2274 = vmul.f32 %v2258, 1.442695
  %v2275 = vpow.pop %v2274
  %v2276 = vmul.f32 %v2259, 1.442695
  %v2277 = vpow.pop %v2276
  %v2278 = vmul.f32 %v2260, 1.442695
  %v2279 = vpow.pop %v2278
  %v2280 = vmul.f32 %v2261, 1.442695
  %v2281 = vpow.pop %v2280
  %v2282 = vmul.f32 %v2262, 1.442695
  %v2283 = vpow.pop %v2282
  %v2284 = vmul.f32 %v2263, 1.442695
  %v2285 = vpow.pop %v2284
  %v2286 = vmul.f32 %v2264, 1.442695
  %v2287 = vpow.pop %v2286
  %v2288 = vmul.f32 %v2265, 1.442695
  %v2289 = vpow.pop %v2288
  %v2290 = vmul.f32 %v2266, 1.442695
  %v2291 = vpow.pop %v2290
  %v2292 = vmul.f32 %v2267, 1.442695
  %v2293 = vpow.pop %v2292
  %v2294 = vmul.f32 %v2268, 1.442695
  %v2295 = vpow.pop %v2294
  %v2296 = vmul.f32 %v2269, 1.442695
  %v2297 = vpow.pop %v2296
  %v2298 = vadd.f32 %v2271, 1.0
  %v2299 = vadd.f32 %v2273, 1.0
  %v2300 = vadd.f32 %v2275, 1.0
  %v2301 = vadd.f32 %v2277, 1.0
  %v2302 = vadd.f32 %v2279, 1.0
  %v2303 = vadd.f32 %v2281, 1.0
  %v2304 = vadd.f32 %v2283, 1.0
  %v2305 = vadd.f32 %v2285, 1.0
  %v2306 = vadd.f32 %v2287, 1.0
  %v2307 = vadd.f32 %v2289, 1.0
  %v2308 = vadd.f32 %v2291, 1.0
  %v2309 = vadd.f32 %v2293, 1.0
  %v2310 = vadd.f32 %v2295, 1.0
  %v2311 = vadd.f32 %v2297, 1.0
  %v2312 = vrcp.pop %v2298
  %v2313 = vrcp.pop %v2299
  %v2314 = vrcp.pop %v2300
  %v2315 = vrcp.pop %v2301
  %v2316 = vrcp.pop %v2302
  %v2317 = vrcp.pop %v2303
  %v2318 = vrcp.pop %v2304
  %v2319 = vrcp.pop %v2305
  %v2320 = vrcp.pop %v2306
  %v2321 = vrcp.pop %v2307
  %v2322 = vrcp.pop %v2308
  %v2323 = vrcp.pop %v2309
  %v2324 = vrcp.pop %v2310
  %v2325 = vrcp.pop %v2311
  %v2326 = vpack.c.bf16 %v2319, %v2312
  %v2327 = vpack.c.bf16 %v2320, %v2313
  %v2328 = vpack.c.bf16 %v2321, %v2314
  %v2329 = vpack.c.bf16 %v2322, %v2315
  %v2330 = vpack.c.bf16 %v2323, %v2316
  %v2331 = vpack.c.bf16 %v2324, %v2317
  %v2332 = vpack.c.bf16 %v2325, %v2318
  %v2340 = vunpack.c.l.b16 %v2326
  %v2341 = vunpack.c.l.b16 %v2327
  %v2342 = vunpack.c.l.b16 %v2328
  %v2343 = vunpack.c.l.b16 %v2329
  %v2344 = vunpack.c.l.b16 %v2330
  %v2345 = vunpack.c.l.b16 %v2331
  %v2346 = vunpack.c.l.b16 %v2332
  %v2347 = vunpack.c.h.b16 %v2326
  %v2348 = vunpack.c.h.b16 %v2327
  %v2349 = vunpack.c.h.b16 %v2328
  %v2350 = vunpack.c.h.b16 %v2329
  %v2351 = vunpack.c.h.b16 %v2330
  %v2352 = vunpack.c.h.b16 %v2331
  %v2353 = vunpack.c.h.b16 %v2332
  %v2354 = vpack.c.b16 %v2341, %v2340
  %v2355 = vpack.c.b16 %v2343, %v2342
  %v2356 = vpack.c.b16 %v2345, %v2344
  %v2357 = vpack.c.b16 %v2346, %v2346
  %v2358 = vpack.c.b16 %v2348, %v2347
  %v2359 = vpack.c.b16 %v2350, %v2349
  %v2360 = vpack.c.b16 %v2352, %v2351
  %v2361 = vpack.c.b16 %v2353, %v2353
  %2370 = vst [vmem:[%s13] sm:$0xff] %v2354
  %2371 = vst [vmem:[%s13 + $0x8] sm:$0xff] %v2355
  %2372 = vst [vmem:[%s13 + $0x10] sm:$0xff] %v2356
  %vm2373 = vcmask 125952
  %2374 = vst.msk [vmem:[%s13 + $0x18] sm:$0xf] %vm2373, %v2357
  %2375 = vst [vmem:[%s13 + $0x1c] sm:$0xff] %v2358
  %2376 = vst [vmem:[%s13 + $0x24] sm:$0xff] %v2359
  %2377 = vst [vmem:[%s13 + $0x2c] sm:$0xff] %v2360
  %2378 = vst.msk [vmem:[%s13 + $0x34] sm:$0xf] %vm2373, %v2361
  // Predicated region
  $region54: #{autoencoder_forward.1} parent=0 // pred_check
    _
  $region55: #{autoencoder_forward.1} parent=0 // pred_check_branch
    %2380 = sbr.rel (0) target = $region57
  $region56: #{autoencoder_forward.1} parent=0 // pred_region
    _
  $region57: #{autoencoder_forward.1} parent=0 // pred_fallthru
    _
  // Predicated region
  $region58: #{autoencoder_forward.1} parent=0 // pred_check
    _
  $region59: #{autoencoder_forward.1} parent=0 // pred_check_branch
    %2382 = sbr.rel (0) target = $region61
  $region60: #{autoencoder_forward.1} parent=0 // pred_region
    _
  $region61: #{autoencoder_forward.1} parent=0 // pred_fallthru
    _
  // Predicated region
  $region62: #{autoencoder_forward.1} parent=0 // pred_check
    _
  $region63: #{autoencoder_forward.1} parent=0 // pred_check_branch
    %2384 = sbr.rel (0) target = $region65
  $region64: #{autoencoder_forward.1} parent=0 // pred_region
    _
  $region65: #{autoencoder_forward.1} parent=0 // pred_fallthru
    _
  // Predicated region
  $region66: #{autoencoder_forward.1} parent=0 // pred_check
    _
  $region67: #{autoencoder_forward.1} parent=0 // pred_check_branch
    %2386 = sbr.rel (0) target = $region69
  $region68: #{autoencoder_forward.1} parent=0 // pred_region
    _
  $region69: #{autoencoder_forward.1} parent=0 // pred_fallthru
    _

</llo_original>
